<compile_context>
chip_gen: v7x
topology: tpu7x:2x2x1
jax: 0.10.0
libtpu: 0.0.40
codegen_flags: <defaults>
</compile_context>

<pallas_src>
import functools

import jax
import jax.numpy as jnp
from jax.experimental import pallas as pl
from jax.experimental.pallas import tpu as pltpu

EPS = 1e-5
LANE = 128

# Older/newer jax spell the TPU compiler-params class differently.
_CompilerParams = getattr(pltpu, "CompilerParams", None) or getattr(
    pltpu, "TPUCompilerParams")


def _round_up(x, m):
    return (x + m - 1) // m * m


def _select_rows(v, start, n, stride):
    """Rows start, start+stride, ..., start+stride*(n-1) of v's leading dim.

    Implemented as a leading-dim reshape + static slice/index so the
    (sublane, lane) layout of the value is never touched.
    """
    if stride == 1:
        return v[start:start + n]
    lead = v.shape[0]
    assert lead % stride == 0
    v4 = v.reshape(lead // stride, stride, *v.shape[1:])
    return v4[start // stride:start // stride + n, start % stride]


# ------------------------------ Pallas kernel ------------------------------ #
def _bottleneck_kernel(x_ref, w1_ref, b1_ref, w2_ref, b2_ref, w3_ref, b3_ref,
                       *rest, stride, has_proj, dims):
    if has_proj:
        ws_ref, bs_ref, o_ref, pad_ref = rest
    else:
        o_ref, pad_ref = rest
        ws_ref = bs_ref = None
    H, W, Ho, Wo, Ws, Cin_p, Cp = dims
    s = stride
    f32, bf16 = jnp.float32, jnp.bfloat16

    # -------- conv1 (1x1) + bn1 + relu, written into the zero-padded halo ----
    # pad_ref layout: (Hp, s, Wpp, Cp); padded row r = image row + 1,
    # padded col c = 8*s + image col, stored at (r, c % s, c // s, :).
    pad_ref[...] = jnp.zeros_like(pad_ref)
    x_phases = []
    for b in range(s):                               # column phase b: cols s*k+b
        xb = x_ref[:, b, :, :].astype(f32)           # (H, Ws, Cin_p)
        x_phases.append(xb)
        xb2d = xb.reshape(H * Ws, Cin_p)
        o1b = jnp.dot(xb2d.astype(bf16), w1_ref[...],
                      preferred_element_type=f32) + b1_ref[...]
        o1b = jnp.maximum(o1b, 0.0)
        pad_ref[1:H + 1, b, 8:8 + Ws, :] = o1b.reshape(H, Ws, Cp)

    # -------- conv2 (3x3, stride, pad=1) + bn2 + relu: 9 MXU matmuls ---------
    acc2 = jnp.zeros((Ho * Wo, Cp), f32)
    for kw in range(3):
        c = 8 * s - 1 + kw                           # padded column of tap kw
        bp, a0 = c % s, c // s
        cols = pad_ref[:, bp, a0:a0 + Wo, :]         # (Hp, Wo, Cp), static slice
        for kh in range(3):
            patch = _select_rows(cols, kh, Ho, s)    # (Ho, Wo, Cp)
            acc2 = acc2 + jnp.dot(
                patch.reshape(Ho * Wo, Cp).astype(bf16),
                w2_ref[kh, kw, :, :],
                preferred_element_type=f32)
    o2 = jnp.maximum(acc2 + b2_ref[...], 0.0)

    # -------- conv3 (1x1) + bn3 ----------------------------------------------
    o3 = jnp.dot(o2.astype(bf16), w3_ref[...],
                 preferred_element_type=f32) + b3_ref[...]

    # -------- shortcut --------------------------------------------------------
    x0 = x_phases[0]                                 # (H, Ws, Cin_p) f32
    if has_proj:
        # strided 1x1 conv: x[s*i, s*j, :] = phase 0 columns, strided rows.
        xs2d = _select_rows(x0, 0, Ho, s).reshape(Ho * Wo, Cin_p)
        sc = jnp.dot(xs2d.astype(bf16), ws_ref[...],
                     preferred_element_type=f32) + bs_ref[...]
    else:
        sc = x0.reshape(H * W, Cin_p)                # identity (stride == 1)

    o_ref[...] = jnp.maximum(o3 + sc, 0.0)


# ------------------------------- JAX wrapper -------------------------------- #
def _fold_bn(gamma, beta, mean, var):
    scale = gamma * jax.lax.rsqrt(var.astype(jnp.float32) + EPS)
    bias = beta - mean * scale
    return scale.astype(jnp.float32), bias.astype(jnp.float32)


def _fold_pad_1x1(w, scale, bias, cin_p, cout_p):
    """(1,1,Cin,Cout) HWIO weight with BN scale folded, zero-padded, bf16."""
    cin, cout = w.shape[-2], w.shape[-1]
    w2d = w.reshape(cin, cout) * scale[None, :]
    w2d = jnp.pad(w2d, ((0, cin_p - cin), (0, cout_p - cout)))
    b = jnp.pad(bias, (0, cout_p - cout)).reshape(1, cout_p)
    return w2d.astype(jnp.bfloat16), b.astype(jnp.float32)


@functools.partial(jax.jit, static_argnames=("stride",))
def bottleneck_forward(x_nchw, params, stride):
    """Pallas Bottleneck.forward (inference-mode BN). NCHW f32 in/out."""
    N, Cin, H, W = x_nchw.shape
    planes = params["w1"].shape[-1]
    out_planes = 4 * planes
    assert H % stride == 0 and W % stride == 0, "CIFAR-style shapes expected"

    Cin_p = _round_up(Cin, LANE)
    Cp = _round_up(planes, LANE)
    Cop = _round_up(out_planes, LANE)
    Ho = (H + 2 - 3) // stride + 1
    Wo = (W + 2 - 3) // stride + 1
    Ws = W // stride                                  # image columns per phase
    Hp = _round_up(H + 2, stride)                     # halo buffer rows
    Wpp = max((8 * stride + 1) // stride + Wo, 8 + Ws)  # halo cols per phase
    has_proj = (stride != 1) or (Cin != out_planes)

    # NCHW -> NHWC, zero-pad channels to a lane multiple, split columns by
    # stride phase (so every in-kernel access is a static slice), bf16.
    x = jnp.transpose(x_nchw, (0, 2, 3, 1)).astype(jnp.float32)
    x = jnp.pad(x, ((0, 0), (0, 0), (0, 0), (0, Cin_p - Cin)))
    x = x.reshape(N, H, Ws, stride, Cin_p).transpose(0, 1, 3, 2, 4)
    x = x.astype(jnp.bfloat16)                        # (N, H, s, Ws, Cin_p)

    s1, b1 = _fold_bn(*params["bn1"])
    s2, b2 = _fold_bn(*params["bn2"])
    s3, b3 = _fold_bn(*params["bn3"])
    w1p, b1p = _fold_pad_1x1(params["w1"], s1, b1, Cin_p, Cp)
    w3p, b3p = _fold_pad_1x1(params["w3"], s3, b3, Cp, Cop)
    w2p = params["w2"] * s2[None, None, None, :]
    w2p = jnp.pad(w2p, ((0, 0), (0, 0), (0, Cp - planes), (0, Cp - planes)))
    w2p = w2p.astype(jnp.bfloat16)                    # (3, 3, Cp, Cp)
    b2p = jnp.pad(b2, (0, Cp - planes)).reshape(1, Cp).astype(jnp.float32)

    inputs = [x, w1p, b1p, w2p, b2p, w3p, b3p]
    in_specs = [
        pl.BlockSpec((None, H, stride, Ws, Cin_p), lambda n: (n, 0, 0, 0, 0)),
        pl.BlockSpec((Cin_p, Cp), lambda n: (0, 0)),
        pl.BlockSpec((1, Cp), lambda n: (0, 0)),
        pl.BlockSpec((3, 3, Cp, Cp), lambda n: (0, 0, 0, 0)),
        pl.BlockSpec((1, Cp), lambda n: (0, 0)),
        pl.BlockSpec((Cp, Cop), lambda n: (0, 0)),
        pl.BlockSpec((1, Cop), lambda n: (0, 0)),
    ]
    if has_proj:
        ss, bs = _fold_bn(*params["bns"])
        wsp, bsp = _fold_pad_1x1(params["ws"], ss, bs, Cin_p, Cop)
        inputs += [wsp, bsp]
        in_specs += [
            pl.BlockSpec((Cin_p, Cop), lambda n: (0, 0)),
            pl.BlockSpec((1, Cop), lambda n: (0, 0)),
        ]

    kernel = functools.partial(
        _bottleneck_kernel, stride=stride, has_proj=has_proj,
        dims=(H, W, Ho, Wo, Ws, Cin_p, Cp))

    flops = 2 * N * (H * W * Cin_p * Cp + Ho * Wo * 9 * Cp * Cp
                     + Ho * Wo * Cp * Cop
                     + (Ho * Wo * Cin_p * Cop if has_proj else 0))
    bytes_accessed = (N * H * W * Cin_p * 2 + N * Ho * Wo * Cop * 4
                      + (Cin_p * Cp + 9 * Cp * Cp + Cp * Cop
                         + (Cin_p * Cop if has_proj else 0)) * 2)

    out = pl.pallas_call(
        kernel,
        out_shape=jax.ShapeDtypeStruct((N, Ho * Wo, Cop), jnp.float32),
        grid=(N,),
        in_specs=in_specs,
        out_specs=pl.BlockSpec((None, Ho * Wo, Cop), lambda n: (n, 0, 0)),
        scratch_shapes=[
            pltpu.VMEM((Hp, stride, Wpp, Cp), jnp.float32),  # 3x3 halo buffer
        ],
        compiler_params=_CompilerParams(
            dimension_semantics=("parallel",),
            vmem_limit_bytes=32 * 1024 * 1024),
        cost_estimate=pl.CostEstimate(
            flops=flops, transcendentals=0, bytes_accessed=bytes_accessed),
    )(*inputs)

    out = out.reshape(N, Ho, Wo, Cop)[..., :out_planes]
    return jnp.transpose(out, (0, 3, 1, 2))           # back to NCHW


# --------------------- Pure-JAX reference (lax convs) ----------------------- #
def bottleneck_reference(x_nchw, params, stride):
    dn = ("NHWC", "HWIO", "NHWC")
    x = jnp.transpose(x_nchw, (0, 2, 3, 1)).astype(jnp.float32)
    Cin = x.shape[-1]
    planes = params["w1"].shape[-1]
    out_planes = 4 * planes

    def bn(y, p):
        g, b, m, v = p
        return (y - m) / jnp.sqrt(v + EPS) * g + b

    o = jax.lax.conv_general_dilated(x, params["w1"], (1, 1), "VALID",
                                     dimension_numbers=dn)
    o = jax.nn.relu(bn(o, params["bn1"]))
    o = jax.lax.conv_general_dilated(o, params["w2"], (stride, stride),
                                     ((1, 1), (1, 1)), dimension_numbers=dn)
    o = jax.nn.relu(bn(o, params["bn2"]))
    o = jax.lax.conv_general_dilated(o, params["w3"], (1, 1), "VALID",
                                     dimension_numbers=dn)
    o = bn(o, params["bn3"])
    if stride != 1 or Cin != out_planes:
        sc = jax.lax.conv_general_dilated(x, params["ws"], (stride, stride),
                                          "VALID", dimension_numbers=dn)
        sc = bn(sc, params["bns"])
    else:
        sc = x
    return jnp.transpose(jax.nn.relu(o + sc), (0, 3, 1, 2))


def init_params(key, in_planes, planes):
    out_planes = 4 * planes
    ks = jax.random.split(key, 8)

    def bn_params(k, c):
        k1, k2, k3, k4 = jax.random.split(k, 4)
        gamma = 1.0 + 0.1 * jax.random.normal(k1, (c,), jnp.float32)
        beta = 0.1 * jax.random.normal(k2, (c,), jnp.float32)
        mean = 0.1 * jax.random.normal(k3, (c,), jnp.float32)
        var = 1.0 + 0.1 * jnp.abs(jax.random.normal(k4, (c,), jnp.float32))
        return (gamma, beta, mean, var)

    return {  # weights stored in HWIO layout
        "w1": 0.1 * jax.random.normal(ks[0], (1, 1, in_planes, planes), jnp.float32),
        "bn1": bn_params(ks[1], planes),
        "w2": 0.1 * jax.random.normal(ks[2], (3, 3, planes, planes), jnp.float32),
        "bn2": bn_params(ks[3], planes),
        "w3": 0.1 * jax.random.normal(ks[4], (1, 1, planes, out_planes), jnp.float32),
        "bn3": bn_params(ks[5], out_planes),
        "ws": 0.1 * jax.random.normal(ks[6], (1, 1, in_planes, out_planes), jnp.float32),
        "bns": bn_params(ks[7], out_planes),
    }


if __name__ == "__main__":
    key = jax.random.PRNGKey(0)
    kx1, kp1, kx2, kp2 = jax.random.split(key, 4)

    def check(name, x, params, stride):
        out = jax.block_until_ready(bottleneck_forward(x, params, stride=stride))
        ref = bottleneck_reference(x, params, stride)
        assert out.shape == ref.shape, (name, out.shape, ref.shape)
        err = float(jnp.max(jnp.abs(out - ref)))
        tol = 1e-2 * (float(jnp.max(jnp.abs(ref))) + 1.0)
        assert err <= tol, f"{name}: max abs err {err} > {tol}"

    # stride-2 block with projection shortcut
    x1 = jax.random.normal(kx1, (2, 16, 16, 16), jnp.float32)   # NCHW
    check("stride2_proj", x1, init_params(kp1, in_planes=16, planes=8), stride=2)

    # stride-1 block with identity shortcut (in_planes == 4 * planes)
    x2 = jax.random.normal(kx2, (2, 32, 16, 16), jnp.float32)   # NCHW
    check("stride1_identity", x2, init_params(kp2, in_planes=32, planes=8), stride=1)

    print("KERNEL_OK")
</pallas_src>

<mosaic_0001>
module attributes {stable_mosaic.version = 11 : i64} {
  func.func @_bottleneck_kernel(%arg0: i32, %arg1: memref<1x16x2x8x128xbf16, #tpu.memory_space<vmem>>, %arg2: memref<128x128xbf16, #tpu.memory_space<vmem>>, %arg3: memref<1x128xf32, #tpu.memory_space<vmem>>, %arg4: memref<3x3x128x128xbf16, #tpu.memory_space<vmem>>, %arg5: memref<1x128xf32, #tpu.memory_space<vmem>>, %arg6: memref<128x128xbf16, #tpu.memory_space<vmem>>, %arg7: memref<1x128xf32, #tpu.memory_space<vmem>>, %arg8: memref<128x128xbf16, #tpu.memory_space<vmem>>, %arg9: memref<1x128xf32, #tpu.memory_space<vmem>>, %arg10: memref<1x64x128xf32, #tpu.memory_space<vmem>>, %arg11: memref<18x2x16x128xf32, #tpu.memory_space<vmem>>) attributes {dimension_semantics = [#tpu.dimension_semantics<parallel>], iteration_bounds = array<i64: 2>, scalar_prefetch = 0 : i64, scratch_operands = 1 : i64, tpu.core_type = #tpu.core_type<tc>, window_params = [{transform_indices = @transform_0, window_bounds = array<i64: 1, 16, 2, 8, 128>}, {pipeline_mode = #tpu.pipeline_mode<synchronous>, transform_indices = @transform_1, window_bounds = array<i64: 128, 128>}, {pipeline_mode = #tpu.pipeline_mode<synchronous>, transform_indices = @transform_2, window_bounds = array<i64: 1, 128>}, {pipeline_mode = #tpu.pipeline_mode<synchronous>, transform_indices = @transform_3, window_bounds = array<i64: 3, 3, 128, 128>}, {pipeline_mode = #tpu.pipeline_mode<synchronous>, transform_indices = @transform_4, window_bounds = array<i64: 1, 128>}, {pipeline_mode = #tpu.pipeline_mode<synchronous>, transform_indices = @transform_5, window_bounds = array<i64: 128, 128>}, {pipeline_mode = #tpu.pipeline_mode<synchronous>, transform_indices = @transform_6, window_bounds = array<i64: 1, 128>}, {pipeline_mode = #tpu.pipeline_mode<synchronous>, transform_indices = @transform_7, window_bounds = array<i64: 128, 128>}, {pipeline_mode = #tpu.pipeline_mode<synchronous>, transform_indices = @transform_8, window_bounds = array<i64: 1, 128>}, {transform_indices = @transform_9, window_bounds = array<i64: 1, 64, 128>}]} {
    %cst = arith.constant 0.000000e+00 : f32
    %0 = vector.broadcast %cst : f32 to vector<18x2x16x128xf32>
    %c0 = arith.constant 0 : index
    %c0_0 = arith.constant 0 : index
    %c0_1 = arith.constant 0 : index
    %c0_2 = arith.constant 0 : index
    %1 = vector.load %arg11[%c0, %c0_0, %c0_1, %c0_2] : memref<18x2x16x128xf32, #tpu.memory_space<vmem>>, vector<18x2x16x128xf32>
    tpu.vector_store %arg11[%c0, %c0_0, %c0_1, %c0_2], %0 {strides = array<i32>} : memref<18x2x16x128xf32, #tpu.memory_space<vmem>>, vector<18x2x16x128xf32>,
    %c0_3 = arith.constant 0 : index
    %c0_4 = arith.constant 0 : index
    %c0_5 = arith.constant 0 : index
    %c0_6 = arith.constant 0 : index
    %c0_7 = arith.constant 0 : index
    %2 = vector.load %arg1[%c0_3, %c0_4, %c0_5, %c0_6, %c0_7] : memref<1x16x2x8x128xbf16, #tpu.memory_space<vmem>>, vector<1x16x1x8x128xbf16>
    %3 = vector.shape_cast %2 : vector<1x16x1x8x128xbf16> to vector<16x8x128xbf16>
    %4 = arith.extf %3 : vector<16x8x128xbf16> to vector<16x8x128xf32>
    %5 = vector.shape_cast %4 : vector<16x8x128xf32> to vector<128x128xf32>
    %6 = arith.truncf %5 : vector<128x128xf32> to vector<128x128xbf16>
    %c0_8 = arith.constant 0 : index
    %c0_9 = arith.constant 0 : index
    %7 = vector.load %arg2[%c0_8, %c0_9] : memref<128x128xbf16, #tpu.memory_space<vmem>>, vector<128x128xbf16>
    %cst_10 = arith.constant dense<0.000000e+00> : vector<128x128xf32>
    %8 = tpu.matmul %6, %7, %cst_10 {dimension_numbers = #tpu.dot_dimension_numbers<[1], [0], [0], [1], [0, 0, 1, 1], [], []>} : vector<128x128xbf16>, vector<128x128xbf16>, vector<128x128xf32> -> vector<128x128xf32>
    %c0_11 = arith.constant 0 : index
    %c0_12 = arith.constant 0 : index
    %9 = vector.load %arg3[%c0_11, %c0_12] : memref<1x128xf32, #tpu.memory_space<vmem>>, vector<1x128xf32>
    %10 = vector.broadcast %9 : vector<1x128xf32> to vector<128x128xf32>
    %11 = arith.addf %8, %10 : vector<128x128xf32>
    %cst_13 = arith.constant 0.000000e+00 : f32
    %12 = vector.broadcast %cst_13 : f32 to vector<128x128xf32>
    %13 = arith.maximumf %11, %12 : vector<128x128xf32>
    %14 = vector.shape_cast %13 : vector<128x128xf32> to vector<16x8x128xf32>
    %c1 = arith.constant 1 : index
    %c0_14 = arith.constant 0 : index
    %c8 = arith.constant 8 : index
    %c0_15 = arith.constant 0 : index
    %15 = vector.load %arg11[%c1, %c0_14, %c8, %c0_15] : memref<18x2x16x128xf32, #tpu.memory_space<vmem>>, vector<16x1x8x128xf32>
    %16 = vector.shape_cast %15 : vector<16x1x8x128xf32> to vector<16x8x128xf32>
    %17 = vector.shape_cast %14 : vector<16x8x128xf32> to vector<16x1x8x128xf32>
    tpu.vector_store %arg11[%c1, %c0_14, %c8, %c0_15], %17 {strides = array<i32>} : memref<18x2x16x128xf32, #tpu.memory_space<vmem>>, vector<16x1x8x128xf32>,
    %c0_16 = arith.constant 0 : index
    %c0_17 = arith.constant 0 : index
    %c1_18 = arith.constant 1 : index
    %c0_19 = arith.constant 0 : index
    %c0_20 = arith.constant 0 : index
    %18 = vector.load %arg1[%c0_16, %c0_17, %c1_18, %c0_19, %c0_20] : memref<1x16x2x8x128xbf16, #tpu.memory_space<vmem>>, vector<1x16x1x8x128xbf16>
    %19 = vector.shape_cast %18 : vector<1x16x1x8x128xbf16> to vector<16x8x128xbf16>
    %20 = arith.extf %19 : vector<16x8x128xbf16> to vector<16x8x128xf32>
    %21 = vector.shape_cast %20 : vector<16x8x128xf32> to vector<128x128xf32>
    %22 = arith.truncf %21 : vector<128x128xf32> to vector<128x128xbf16>
    %c0_21 = arith.constant 0 : index
    %c0_22 = arith.constant 0 : index
    %23 = vector.load %arg2[%c0_21, %c0_22] : memref<128x128xbf16, #tpu.memory_space<vmem>>, vector<128x128xbf16>
    %cst_23 = arith.constant dense<0.000000e+00> : vector<128x128xf32>
    %24 = tpu.matmul %22, %23, %cst_23 {dimension_numbers = #tpu.dot_dimension_numbers<[1], [0], [0], [1], [0, 0, 1, 1], [], []>} : vector<128x128xbf16>, vector<128x128xbf16>, vector<128x128xf32> -> vector<128x128xf32>
    %c0_24 = arith.constant 0 : index
    %c0_25 = arith.constant 0 : index
    %25 = vector.load %arg3[%c0_24, %c0_25] : memref<1x128xf32, #tpu.memory_space<vmem>>, vector<1x128xf32>
    %26 = vector.broadcast %25 : vector<1x128xf32> to vector<128x128xf32>
    %27 = arith.addf %24, %26 : vector<128x128xf32>
    %cst_26 = arith.constant 0.000000e+00 : f32
    %28 = vector.broadcast %cst_26 : f32 to vector<128x128xf32>
    %29 = arith.maximumf %27, %28 : vector<128x128xf32>
    %30 = vector.shape_cast %29 : vector<128x128xf32> to vector<16x8x128xf32>
    %c1_27 = arith.constant 1 : index
    %c1_28 = arith.constant 1 : index
    %c8_29 = arith.constant 8 : index
    %c0_30 = arith.constant 0 : index
    %31 = vector.load %arg11[%c1_27, %c1_28, %c8_29, %c0_30] : memref<18x2x16x128xf32, #tpu.memory_space<vmem>>, vector<16x1x8x128xf32>
    %32 = vector.shape_cast %31 : vector<16x1x8x128xf32> to vector<16x8x128xf32>
    %33 = vector.shape_cast %30 : vector<16x8x128xf32> to vector<16x1x8x128xf32>
    tpu.vector_store %arg11[%c1_27, %c1_28, %c8_29, %c0_30], %33 {strides = array<i32>} : memref<18x2x16x128xf32, #tpu.memory_space<vmem>>, vector<16x1x8x128xf32>,
    %cst_31 = arith.constant 0.000000e+00 : f32
    %34 = vector.broadcast %cst_31 : f32 to vector<64x128xf32>
    %c0_32 = arith.constant 0 : index
    %c1_33 = arith.constant 1 : index
    %c7 = arith.constant 7 : index
    %c0_34 = arith.constant 0 : index
    %35 = vector.load %arg11[%c0_32, %c1_33, %c7, %c0_34] : memref<18x2x16x128xf32, #tpu.memory_space<vmem>>, vector<18x1x8x128xf32>
    %36 = vector.shape_cast %35 : vector<18x1x8x128xf32> to vector<18x8x128xf32>
    %37 = vector.shape_cast %36 : vector<18x8x128xf32> to vector<9x2x8x128xf32>
    %38 = vector.extract_strided_slice %37 {offsets = [0, 0, 0, 0], sizes = [8, 1, 8, 128], strides = [1, 1, 1, 1]} : vector<9x2x8x128xf32> to vector<8x1x8x128xf32>
    %39 = vector.shape_cast %38 : vector<8x1x8x128xf32> to vector<8x8x128xf32>
    %40 = vector.shape_cast %39 : vector<8x8x128xf32> to vector<64x128xf32>
    %41 = arith.truncf %40 : vector<64x128xf32> to vector<64x128xbf16>
    %c0_35 = arith.constant 0 : index
    %c0_36 = arith.constant 0 : index
    %c0_37 = arith.constant 0 : index
    %c0_38 = arith.constant 0 : index
    %42 = vector.load %arg4[%c0_35, %c0_36, %c0_37, %c0_38] : memref<3x3x128x128xbf16, #tpu.memory_space<vmem>>, vector<1x1x128x128xbf16>
    %43 = vector.shape_cast %42 : vector<1x1x128x128xbf16> to vector<128x128xbf16>
    %cst_39 = arith.constant dense<0.000000e+00> : vector<64x128xf32>
    %44 = tpu.matmul %41, %43, %cst_39 {dimension_numbers = #tpu.dot_dimension_numbers<[1], [0], [0], [1], [0, 0, 1, 1], [], []>} : vector<64x128xbf16>, vector<128x128xbf16>, vector<64x128xf32> -> vector<64x128xf32>
    %45 = arith.addf %34, %44 : vector<64x128xf32>
    %46 = vector.shape_cast %36 : vector<18x8x128xf32> to vector<9x2x8x128xf32>
    %47 = vector.extract_strided_slice %46 {offsets = [0, 1, 0, 0], sizes = [8, 1, 8, 128], strides = [1, 1, 1, 1]} : vector<9x2x8x128xf32> to vector<8x1x8x128xf32>
    %48 = vector.shape_cast %47 : vector<8x1x8x128xf32> to vector<8x8x128xf32>
    %49 = vector.shape_cast %48 : vector<8x8x128xf32> to vector<64x128xf32>
    %50 = arith.truncf %49 : vector<64x128xf32> to vector<64x128xbf16>
    %c1_40 = arith.constant 1 : index
    %c0_41 = arith.constant 0 : index
    %c0_42 = arith.constant 0 : index
    %c0_43 = arith.constant 0 : index
    %51 = vector.load %arg4[%c1_40, %c0_41, %c0_42, %c0_43] : memref<3x3x128x128xbf16, #tpu.memory_space<vmem>>, vector<1x1x128x128xbf16>
    %52 = vector.shape_cast %51 : vector<1x1x128x128xbf16> to vector<128x128xbf16>
    %cst_44 = arith.constant dense<0.000000e+00> : vector<64x128xf32>
    %53 = tpu.matmul %50, %52, %cst_44 {dimension_numbers = #tpu.dot_dimension_numbers<[1], [0], [0], [1], [0, 0, 1, 1], [], []>} : vector<64x128xbf16>, vector<128x128xbf16>, vector<64x128xf32> -> vector<64x128xf32>
    %54 = arith.addf %45, %53 : vector<64x128xf32>
    %55 = vector.shape_cast %36 : vector<18x8x128xf32> to vector<9x2x8x128xf32>
    %56 = vector.extract_strided_slice %55 {offsets = [1, 0, 0, 0], sizes = [8, 1, 8, 128], strides = [1, 1, 1, 1]} : vector<9x2x8x128xf32> to vector<8x1x8x128xf32>
    %57 = vector.shape_cast %56 : vector<8x1x8x128xf32> to vector<8x8x128xf32>
    %58 = vector.shape_cast %57 : vector<8x8x128xf32> to vector<64x128xf32>
    %59 = arith.truncf %58 : vector<64x128xf32> to vector<64x128xbf16>
    %c2 = arith.constant 2 : index
    %c0_45 = arith.constant 0 : index
    %c0_46 = arith.constant 0 : index
    %c0_47 = arith.constant 0 : index
    %60 = vector.load %arg4[%c2, %c0_45, %c0_46, %c0_47] : memref<3x3x128x128xbf16, #tpu.memory_space<vmem>>, vector<1x1x128x128xbf16>
    %61 = vector.shape_cast %60 : vector<1x1x128x128xbf16> to vector<128x128xbf16>
    %cst_48 = arith.constant dense<0.000000e+00> : vector<64x128xf32>
    %62 = tpu.matmul %59, %61, %cst_48 {dimension_numbers = #tpu.dot_dimension_numbers<[1], [0], [0], [1], [0, 0, 1, 1], [], []>} : vector<64x128xbf16>, vector<128x128xbf16>, vector<64x128xf32> -> vector<64x128xf32>
    %63 = arith.addf %54, %62 : vector<64x128xf32>
    %c0_49 = arith.constant 0 : index
    %c0_50 = arith.constant 0 : index
    %c8_51 = arith.constant 8 : index
    %c0_52 = arith.constant 0 : index
    %64 = vector.load %arg11[%c0_49, %c0_50, %c8_51, %c0_52] : memref<18x2x16x128xf32, #tpu.memory_space<vmem>>, vector<18x1x8x128xf32>
    %65 = vector.shape_cast %64 : vector<18x1x8x128xf32> to vector<18x8x128xf32>
    %66 = vector.shape_cast %65 : vector<18x8x128xf32> to vector<9x2x8x128xf32>
    %67 = vector.extract_strided_slice %66 {offsets = [0, 0, 0, 0], sizes = [8, 1, 8, 128], strides = [1, 1, 1, 1]} : vector<9x2x8x128xf32> to vector<8x1x8x128xf32>
    %68 = vector.shape_cast %67 : vector<8x1x8x128xf32> to vector<8x8x128xf32>
    %69 = vector.shape_cast %68 : vector<8x8x128xf32> to vector<64x128xf32>
    %70 = arith.truncf %69 : vector<64x128xf32> to vector<64x128xbf16>
    %c0_53 = arith.constant 0 : index
    %c1_54 = arith.constant 1 : index
    %c0_55 = arith.constant 0 : index
    %c0_56 = arith.constant 0 : index
    %71 = vector.load %arg4[%c0_53, %c1_54, %c0_55, %c0_56] : memref<3x3x128x128xbf16, #tpu.memory_space<vmem>>, vector<1x1x128x128xbf16>
    %72 = vector.shape_cast %71 : vector<1x1x128x128xbf16> to vector<128x128xbf16>
    %cst_57 = arith.constant dense<0.000000e+00> : vector<64x128xf32>
    %73 = tpu.matmul %70, %72, %cst_57 {dimension_numbers = #tpu.dot_dimension_numbers<[1], [0], [0], [1], [0, 0, 1, 1], [], []>} : vector<64x128xbf16>, vector<128x128xbf16>, vector<64x128xf32> -> vector<64x128xf32>
    %74 = arith.addf %63, %73 : vector<64x128xf32>
    %75 = vector.shape_cast %65 : vector<18x8x128xf32> to vector<9x2x8x128xf32>
    %76 = vector.extract_strided_slice %75 {offsets = [0, 1, 0, 0], sizes = [8, 1, 8, 128], strides = [1, 1, 1, 1]} : vector<9x2x8x128xf32> to vector<8x1x8x128xf32>
    %77 = vector.shape_cast %76 : vector<8x1x8x128xf32> to vector<8x8x128xf32>
    %78 = vector.shape_cast %77 : vector<8x8x128xf32> to vector<64x128xf32>
    %79 = arith.truncf %78 : vector<64x128xf32> to vector<64x128xbf16>
    %c1_58 = arith.constant 1 : index
    %c1_59 = arith.constant 1 : index
    %c0_60 = arith.constant 0 : index
    %c0_61 = arith.constant 0 : index
    %80 = vector.load %arg4[%c1_58, %c1_59, %c0_60, %c0_61] : memref<3x3x128x128xbf16, #tpu.memory_space<vmem>>, vector<1x1x128x128xbf16>
    %81 = vector.shape_cast %80 : vector<1x1x128x128xbf16> to vector<128x128xbf16>
    %cst_62 = arith.constant dense<0.000000e+00> : vector<64x128xf32>
    %82 = tpu.matmul %79, %81, %cst_62 {dimension_numbers = #tpu.dot_dimension_numbers<[1], [0], [0], [1], [0, 0, 1, 1], [], []>} : vector<64x128xbf16>, vector<128x128xbf16>, vector<64x128xf32> -> vector<64x128xf32>
    %83 = arith.addf %74, %82 : vector<64x128xf32>
    %84 = vector.shape_cast %65 : vector<18x8x128xf32> to vector<9x2x8x128xf32>
    %85 = vector.extract_strided_slice %84 {offsets = [1, 0, 0, 0], sizes = [8, 1, 8, 128], strides = [1, 1, 1, 1]} : vector<9x2x8x128xf32> to vector<8x1x8x128xf32>
    %86 = vector.shape_cast %85 : vector<8x1x8x128xf32> to vector<8x8x128xf32>
    %87 = vector.shape_cast %86 : vector<8x8x128xf32> to vector<64x128xf32>
    %88 = arith.truncf %87 : vector<64x128xf32> to vector<64x128xbf16>
    %c2_63 = arith.constant 2 : index
    %c1_64 = arith.constant 1 : index
    %c0_65 = arith.constant 0 : index
    %c0_66 = arith.constant 0 : index
    %89 = vector.load %arg4[%c2_63, %c1_64, %c0_65, %c0_66] : memref<3x3x128x128xbf16, #tpu.memory_space<vmem>>, vector<1x1x128x128xbf16>
    %90 = vector.shape_cast %89 : vector<1x1x128x128xbf16> to vector<128x128xbf16>
    %cst_67 = arith.constant dense<0.000000e+00> : vector<64x128xf32>
    %91 = tpu.matmul %88, %90, %cst_67 {dimension_numbers = #tpu.dot_dimension_numbers<[1], [0], [0], [1], [0, 0, 1, 1], [], []>} : vector<64x128xbf16>, vector<128x128xbf16>, vector<64x128xf32> -> vector<64x128xf32>
    %92 = arith.addf %83, %91 : vector<64x128xf32>
    %c0_68 = arith.constant 0 : index
    %c1_69 = arith.constant 1 : index
    %c8_70 = arith.constant 8 : index
    %c0_71 = arith.constant 0 : index
    %93 = vector.load %arg11[%c0_68, %c1_69, %c8_70, %c0_71] : memref<18x2x16x128xf32, #tpu.memory_space<vmem>>, vector<18x1x8x128xf32>
    %94 = vector.shape_cast %93 : vector<18x1x8x128xf32> to vector<18x8x128xf32>
    %95 = vector.shape_cast %94 : vector<18x8x128xf32> to vector<9x2x8x128xf32>
    %96 = vector.extract_strided_slice %95 {offsets = [0, 0, 0, 0], sizes = [8, 1, 8, 128], strides = [1, 1, 1, 1]} : vector<9x2x8x128xf32> to vector<8x1x8x128xf32>
    %97 = vector.shape_cast %96 : vector<8x1x8x128xf32> to vector<8x8x128xf32>
    %98 = vector.shape_cast %97 : vector<8x8x128xf32> to vector<64x128xf32>
    %99 = arith.truncf %98 : vector<64x128xf32> to vector<64x128xbf16>
    %c0_72 = arith.constant 0 : index
    %c2_73 = arith.constant 2 : index
    %c0_74 = arith.constant 0 : index
    %c0_75 = arith.constant 0 : index
    %100 = vector.load %arg4[%c0_72, %c2_73, %c0_74, %c0_75] : memref<3x3x128x128xbf16, #tpu.memory_space<vmem>>, vector<1x1x128x128xbf16>
    %101 = vector.shape_cast %100 : vector<1x1x128x128xbf16> to vector<128x128xbf16>
    %cst_76 = arith.constant dense<0.000000e+00> : vector<64x128xf32>
    %102 = tpu.matmul %99, %101, %cst_76 {dimension_numbers = #tpu.dot_dimension_numbers<[1], [0], [0], [1], [0, 0, 1, 1], [], []>} : vector<64x128xbf16>, vector<128x128xbf16>, vector<64x128xf32> -> vector<64x128xf32>
    %103 = arith.addf %92, %102 : vector<64x128xf32>
    %104 = vector.shape_cast %94 : vector<18x8x128xf32> to vector<9x2x8x128xf32>
    %105 = vector.extract_strided_slice %104 {offsets = [0, 1, 0, 0], sizes = [8, 1, 8, 128], strides = [1, 1, 1, 1]} : vector<9x2x8x128xf32> to vector<8x1x8x128xf32>
    %106 = vector.shape_cast %105 : vector<8x1x8x128xf32> to vector<8x8x128xf32>
    %107 = vector.shape_cast %106 : vector<8x8x128xf32> to vector<64x128xf32>
    %108 = arith.truncf %107 : vector<64x128xf32> to vector<64x128xbf16>
    %c1_77 = arith.constant 1 : index
    %c2_78 = arith.constant 2 : index
    %c0_79 = arith.constant 0 : index
    %c0_80 = arith.constant 0 : index
    %109 = vector.load %arg4[%c1_77, %c2_78, %c0_79, %c0_80] : memref<3x3x128x128xbf16, #tpu.memory_space<vmem>>, vector<1x1x128x128xbf16>
    %110 = vector.shape_cast %109 : vector<1x1x128x128xbf16> to vector<128x128xbf16>
    %cst_81 = arith.constant dense<0.000000e+00> : vector<64x128xf32>
    %111 = tpu.matmul %108, %110, %cst_81 {dimension_numbers = #tpu.dot_dimension_numbers<[1], [0], [0], [1], [0, 0, 1, 1], [], []>} : vector<64x128xbf16>, vector<128x128xbf16>, vector<64x128xf32> -> vector<64x128xf32>
    %112 = arith.addf %103, %111 : vector<64x128xf32>
    %113 = vector.shape_cast %94 : vector<18x8x128xf32> to vector<9x2x8x128xf32>
    %114 = vector.extract_strided_slice %113 {offsets = [1, 0, 0, 0], sizes = [8, 1, 8, 128], strides = [1, 1, 1, 1]} : vector<9x2x8x128xf32> to vector<8x1x8x128xf32>
    %115 = vector.shape_cast %114 : vector<8x1x8x128xf32> to vector<8x8x128xf32>
    %116 = vector.shape_cast %115 : vector<8x8x128xf32> to vector<64x128xf32>
    %117 = arith.truncf %116 : vector<64x128xf32> to vector<64x128xbf16>
    %c2_82 = arith.constant 2 : index
    %c2_83 = arith.constant 2 : index
    %c0_84 = arith.constant 0 : index
    %c0_85 = arith.constant 0 : index
    %118 = vector.load %arg4[%c2_82, %c2_83, %c0_84, %c0_85] : memref<3x3x128x128xbf16, #tpu.memory_space<vmem>>, vector<1x1x128x128xbf16>
    %119 = vector.shape_cast %118 : vector<1x1x128x128xbf16> to vector<128x128xbf16>
    %cst_86 = arith.constant dense<0.000000e+00> : vector<64x128xf32>
    %120 = tpu.matmul %117, %119, %cst_86 {dimension_numbers = #tpu.dot_dimension_numbers<[1], [0], [0], [1], [0, 0, 1, 1], [], []>} : vector<64x128xbf16>, vector<128x128xbf16>, vector<64x128xf32> -> vector<64x128xf32>
    %121 = arith.addf %112, %120 : vector<64x128xf32>
    %c0_87 = arith.constant 0 : index
    %c0_88 = arith.constant 0 : index
    %122 = vector.load %arg5[%c0_87, %c0_88] : memref<1x128xf32, #tpu.memory_space<vmem>>, vector<1x128xf32>
    %123 = vector.broadcast %122 : vector<1x128xf32> to vector<64x128xf32>
    %124 = arith.addf %121, %123 : vector<64x128xf32>
    %cst_89 = arith.constant 0.000000e+00 : f32
    %125 = vector.broadcast %cst_89 : f32 to vector<64x128xf32>
    %126 = arith.maximumf %124, %125 : vector<64x128xf32>
    %127 = arith.truncf %126 : vector<64x128xf32> to vector<64x128xbf16>
    %c0_90 = arith.constant 0 : index
    %c0_91 = arith.constant 0 : index
    %128 = vector.load %arg6[%c0_90, %c0_91] : memref<128x128xbf16, #tpu.memory_space<vmem>>, vector<128x128xbf16>
    %cst_92 = arith.constant dense<0.000000e+00> : vector<64x128xf32>
    %129 = tpu.matmul %127, %128, %cst_92 {dimension_numbers = #tpu.dot_dimension_numbers<[1], [0], [0], [1], [0, 0, 1, 1], [], []>} : vector<64x128xbf16>, vector<128x128xbf16>, vector<64x128xf32> -> vector<64x128xf32>
    %c0_93 = arith.constant 0 : index
    %c0_94 = arith.constant 0 : index
    %130 = vector.load %arg7[%c0_93, %c0_94] : memref<1x128xf32, #tpu.memory_space<vmem>>, vector<1x128xf32>
    %131 = vector.broadcast %130 : vector<1x128xf32> to vector<64x128xf32>
    %132 = arith.addf %129, %131 : vector<64x128xf32>
    %133 = vector.shape_cast %4 : vector<16x8x128xf32> to vector<8x2x8x128xf32>
    %134 = vector.extract_strided_slice %133 {offsets = [0, 0, 0, 0], sizes = [8, 1, 8, 128], strides = [1, 1, 1, 1]} : vector<8x2x8x128xf32> to vector<8x1x8x128xf32>
    %135 = vector.shape_cast %134 : vector<8x1x8x128xf32> to vector<8x8x128xf32>
    %136 = vector.shape_cast %135 : vector<8x8x128xf32> to vector<64x128xf32>
    %137 = arith.truncf %136 : vector<64x128xf32> to vector<64x128xbf16>
    %c0_95 = arith.constant 0 : index
    %c0_96 = arith.constant 0 : index
    %138 = vector.load %arg8[%c0_95, %c0_96] : memref<128x128xbf16, #tpu.memory_space<vmem>>, vector<128x128xbf16>
    %cst_97 = arith.constant dense<0.000000e+00> : vector<64x128xf32>
    %139 = tpu.matmul %137, %138, %cst_97 {dimension_numbers = #tpu.dot_dimension_numbers<[1], [0], [0], [1], [0, 0, 1, 1], [], []>} : vector<64x128xbf16>, vector<128x128xbf16>, vector<64x128xf32> -> vector<64x128xf32>
    %c0_98 = arith.constant 0 : index
    %c0_99 = arith.constant 0 : index
    %140 = vector.load %arg9[%c0_98, %c0_99] : memref<1x128xf32, #tpu.memory_space<vmem>>, vector<1x128xf32>
    %141 = vector.broadcast %140 : vector<1x128xf32> to vector<64x128xf32>
    %142 = arith.addf %139, %141 : vector<64x128xf32>
    %143 = arith.addf %132, %142 : vector<64x128xf32>
    %cst_100 = arith.constant 0.000000e+00 : f32
    %144 = vector.broadcast %cst_100 : f32 to vector<64x128xf32>
    %145 = arith.maximumf %143, %144 : vector<64x128xf32>
    %c0_101 = arith.constant 0 : index
    %c0_102 = arith.constant 0 : index
    %c0_103 = arith.constant 0 : index
    %146 = vector.load %arg10[%c0_101, %c0_102, %c0_103] : memref<1x64x128xf32, #tpu.memory_space<vmem>>, vector<1x64x128xf32>
    %147 = vector.shape_cast %146 : vector<1x64x128xf32> to vector<64x128xf32>
    %148 = vector.shape_cast %145 : vector<64x128xf32> to vector<1x64x128xf32>
    tpu.vector_store %arg10[%c0_101, %c0_102, %c0_103], %148 {strides = array<i32>} : memref<1x64x128xf32, #tpu.memory_space<vmem>>, vector<1x64x128xf32>,
    return
  }
  func.func @transform_0(%arg0: i32) -> (i32, i32, i32, i32, i32) {
    %c0_i32 = arith.constant 0 : i32
    %c0_i32_0 = arith.constant 0 : i32
    %c0_i32_1 = arith.constant 0 : i32
    %c0_i32_2 = arith.constant 0 : i32
    %c0_i32_3 = arith.constant 0 : i32
    return %arg0, %c0_i32, %c0_i32_0, %c0_i32_1, %c0_i32_2 : i32, i32, i32, i32, i32
  }
  func.func @transform_1(%arg0: i32) -> (i32, i32) {
    %c0_i32 = arith.constant 0 : i32
    %c0_i32_0 = arith.constant 0 : i32
    %c0_i32_1 = arith.constant 0 : i32
    return %c0_i32, %c0_i32_0 : i32, i32
  }
  func.func @transform_2(%arg0: i32) -> (i32, i32) {
    %c0_i32 = arith.constant 0 : i32
    %c0_i32_0 = arith.constant 0 : i32
    %c0_i32_1 = arith.constant 0 : i32
    return %c0_i32, %c0_i32_0 : i32, i32
  }
  func.func @transform_3(%arg0: i32) -> (i32, i32, i32, i32) {
    %c0_i32 = arith.constant 0 : i32
    %c0_i32_0 = arith.constant 0 : i32
    %c0_i32_1 = arith.constant 0 : i32
    %c0_i32_2 = arith.constant 0 : i32
    %c0_i32_3 = arith.constant 0 : i32
    return %c0_i32, %c0_i32_0, %c0_i32_1, %c0_i32_2 : i32, i32, i32, i32
  }
  func.func @transform_4(%arg0: i32) -> (i32, i32) {
    %c0_i32 = arith.constant 0 : i32
    %c0_i32_0 = arith.constant 0 : i32
    %c0_i32_1 = arith.constant 0 : i32
    return %c0_i32, %c0_i32_0 : i32, i32
  }
  func.func @transform_5(%arg0: i32) -> (i32, i32) {
    %c0_i32 = arith.constant 0 : i32
    %c0_i32_0 = arith.constant 0 : i32
    %c0_i32_1 = arith.constant 0 : i32
    return %c0_i32, %c0_i32_0 : i32, i32
  }
  func.func @transform_6(%arg0: i32) -> (i32, i32) {
    %c0_i32 = arith.constant 0 : i32
    %c0_i32_0 = arith.constant 0 : i32
    %c0_i32_1 = arith.constant 0 : i32
    return %c0_i32, %c0_i32_0 : i32, i32
  }
  func.func @transform_7(%arg0: i32) -> (i32, i32) {
    %c0_i32 = arith.constant 0 : i32
    %c0_i32_0 = arith.constant 0 : i32
    %c0_i32_1 = arith.constant 0 : i32
    return %c0_i32, %c0_i32_0 : i32, i32
  }
  func.func @transform_8(%arg0: i32) -> (i32, i32) {
    %c0_i32 = arith.constant 0 : i32
    %c0_i32_0 = arith.constant 0 : i32
    %c0_i32_1 = arith.constant 0 : i32
    return %c0_i32, %c0_i32_0 : i32, i32
  }
  func.func @transform_9(%arg0: i32) -> (i32, i32, i32) {
    %c0_i32 = arith.constant 0 : i32
    %c0_i32_0 = arith.constant 0 : i32
    %c0_i32_1 = arith.constant 0 : i32
    return %arg0, %c0_i32, %c0_i32_0 : i32, i32, i32
  }
}

</mosaic_0001>

<llo_original>
// kernel: bottleneck_forward.1
$region0: #{bottleneck_forward.1}
  #allocation0 [shape = 'u32[]', space=smem, size = 0x4, offset = 0x4, fixed_abs, tag = 'smem constant byte address 0x4 - core index']
  #allocation1 [shape = 'u32[144,128]{1,0:T(1,128)}', space=vmem, size = 0x12000, scoped, tag = 'internal scratch']
  #allocation2 [shape = 'f32[18,2,16,128]{3,2,1,0:T(8,128)}', space=vmem, size = 0x48000, scoped, tag = 'scratch operand']
  %s0 = inlined_call_operand.vmem [shape: bf16[2,16,2,8,128], index: 0, kind: input, shape index: {}]
  %s1 = inlined_call_operand.vmem [shape: bf16[128,128], index: 1, kind: input, shape index: {}]
  %s2 = inlined_call_operand.vmem [shape: f32[1,128], index: 2, kind: input, shape index: {}]
  %s3 = inlined_call_operand.vmem [shape: bf16[3,3,128,128], index: 3, kind: input, shape index: {}]
  %s4 = inlined_call_operand.vmem [shape: f32[1,128], index: 4, kind: input, shape index: {}]
  %s5 = inlined_call_operand.vmem [shape: bf16[128,128], index: 5, kind: input, shape index: {}]
  %s6 = inlined_call_operand.vmem [shape: f32[1,128], index: 6, kind: input, shape index: {}]
  %s7 = inlined_call_operand.vmem [shape: bf16[128,128], index: 7, kind: input, shape index: {}]
  %s8 = inlined_call_operand.vmem [shape: f32[1,128], index: 8, kind: input, shape index: {}]
  %s9 = inlined_call_operand.vmem [shape: f32[2,64,128], index: 9, kind: output, shape index: {}]
  %s10 = sld [smem:[#allocation0]]
  $region69: #{bottleneck_forward.1} parent=0
    _
  %s12 = ssub.s32 1, %s10
  %s13 = scalar_select 0, %s12, %s10
  loop: start=0, step=1, limit=4
  $region2: #{bottleneck_forward.1} parent=0 // loop_pre_header
    _
  $region3: #{bottleneck_forward.1} parent=0 // loop_header
    %s15 = sphi 0, %s19
    %p16 = scmp.ge.s32.totalorder %s15, 4
    %s25 = sphi 0, %s27
    %s28 = sphi 0, %s25
    %s29 = sphi 0, %s28
    %s45 = sphi 0, %s29
    %s49 = sphi 0, %s49
    %s51 = sphi 0, %s49
    %s52 = sphi 0, %s51
    %s66 = sphi 0, %s52
    %s70 = sphi 0, %s70
    %s72 = sphi 0, %s70
    %s73 = sphi 0, %s72
    %s87 = sphi 0, %s73
    %s91 = sphi 0, %s91
    %s93 = sphi 0, %s91
    %s94 = sphi 0, %s93
    %s108 = sphi 0, %s94
    %s112 = sphi 0, %s112
    %s114 = sphi 0, %s112
    %s115 = sphi 0, %s114
    %s129 = sphi 0, %s115
    %s133 = sphi 0, %s133
    %s135 = sphi 0, %s133
    %s136 = sphi 0, %s135
    %s150 = sphi 0, %s136
    %s154 = sphi 0, %s154
    %s156 = sphi 0, %s154
    %s157 = sphi 0, %s156
    %s171 = sphi 0, %s157
    %s175 = sphi 0, %s175
    %s177 = sphi 0, %s175
    %s178 = sphi 0, %s177
    %s192 = sphi 0, %s178
    %s196 = sphi 0, %s196
    %s198 = sphi 0, %s196
    %s199 = sphi 0, %s198
    %s213 = sphi 0, %s199
    %s219 = sphi 0, %s221
    %s222 = sphi 0, %s219
    %s223 = sphi 0, %s222
    %s239 = sphi 0, %s223
  $region4: #{bottleneck_forward.1} parent=0 // loop_header_branch
    %18 = sbr.rel (%p16) target = $region8
  $region5: #{bottleneck_forward.1} parent=0 // loop_body
    %s20 = ssub.s32 %s15, 1
    %s21 = ssub.s32 %s15, 2
    %s22 = sadd.s32 %s15, 1
    %s23 = ssub.s32 %s15, %s22
    %p24 = scmp.eq.s32.totalorder %s23, 0
    %s26 = sadd.s32 %s25, 1
    %s27 = scalar_select %p24, %s25, %s26
    %p30 = pneg %p24
    %p31 = scmp.eq.s32.totalorder %s15, 1
    %p32 = por %p30, %p31
    %p33 = scmp.ne.s32.totalorder %s25, %s28
    %p34 = scmp.eq.s32.totalorder %s15, 0
    %p35 = por %p33, %p34
    %p36 = scmp.ne.s32.totalorder %s25, %s28
    %p37 = scmp.eq.s32.totalorder %s20, 1
    %p38 = por %p36, %p37
    %p39 = scmp.ne.s32.totalorder %s28, %s29
    %p40 = scmp.eq.s32.totalorder %s20, 0
    %p41 = por %p39, %p40
    %p42 = scmp.ne.s32.totalorder %s28, %s29
    %p43 = scmp.eq.s32.totalorder %s21, 1
    %p44 = por %p42, %p43
    %p46 = scmp.ne.s32.totalorder %s29, %s45
    %p47 = scmp.eq.s32.totalorder %s21, 0
    %p48 = por %p46, %p47
    %s50 = sadd.s32 %s49, 1
    %p53 = scmp.eq.s32.totalorder %s15, 1
    %p54 = scmp.ne.s32.totalorder %s49, %s51
    %p55 = scmp.eq.s32.totalorder %s15, 0
    %p56 = por %p54, %p55
    %p57 = scmp.ne.s32.totalorder %s49, %s51
    %p58 = scmp.eq.s32.totalorder %s20, 1
    %p59 = por %p57, %p58
    %p60 = scmp.ne.s32.totalorder %s51, %s52
    %p61 = scmp.eq.s32.totalorder %s20, 0
    %p62 = por %p60, %p61
    %p63 = scmp.ne.s32.totalorder %s51, %s52
    %p64 = scmp.eq.s32.totalorder %s21, 1
    %p65 = por %p63, %p64
    %p67 = scmp.ne.s32.totalorder %s52, %s66
    %p68 = scmp.eq.s32.totalorder %s21, 0
    %p69 = por %p67, %p68
    %s71 = sadd.s32 %s70, 1
    %p74 = scmp.eq.s32.totalorder %s15, 1
    %p75 = scmp.ne.s32.totalorder %s70, %s72
    %p76 = scmp.eq.s32.totalorder %s15, 0
    %p77 = por %p75, %p76
    %p78 = scmp.ne.s32.totalorder %s70, %s72
    %p79 = scmp.eq.s32.totalorder %s20, 1
    %p80 = por %p78, %p79
    %p81 = scmp.ne.s32.totalorder %s72, %s73
    %p82 = scmp.eq.s32.totalorder %s20, 0
    %p83 = por %p81, %p82
    %p84 = scmp.ne.s32.totalorder %s72, %s73
    %p85 = scmp.eq.s32.totalorder %s21, 1
    %p86 = por %p84, %p85
    %p88 = scmp.ne.s32.totalorder %s73, %s87
    %p89 = scmp.eq.s32.totalorder %s21, 0
    %p90 = por %p88, %p89
    %s92 = sadd.s32 %s91, 1
    %p95 = scmp.eq.s32.totalorder %s15, 1
    %p96 = scmp.ne.s32.totalorder %s91, %s93
    %p97 = scmp.eq.s32.totalorder %s15, 0
    %p98 = por %p96, %p97
    %p99 = scmp.ne.s32.totalorder %s91, %s93
    %p100 = scmp.eq.s32.totalorder %s20, 1
    %p101 = por %p99, %p100
    %p102 = scmp.ne.s32.totalorder %s93, %s94
    %p103 = scmp.eq.s32.totalorder %s20, 0
    %p104 = por %p102, %p103
    %p105 = scmp.ne.s32.totalorder %s93, %s94
    %p106 = scmp.eq.s32.totalorder %s21, 1
    %p107 = por %p105, %p106
    %p109 = scmp.ne.s32.totalorder %s94, %s108
    %p110 = scmp.eq.s32.totalorder %s21, 0
    %p111 = por %p109, %p110
    %s113 = sadd.s32 %s112, 1
    %p116 = scmp.eq.s32.totalorder %s15, 1
    %p117 = scmp.ne.s32.totalorder %s112, %s114
    %p118 = scmp.eq.s32.totalorder %s15, 0
    %p119 = por %p117, %p118
    %p120 = scmp.ne.s32.totalorder %s112, %s114
    %p121 = scmp.eq.s32.totalorder %s20, 1
    %p122 = por %p120, %p121
    %p123 = scmp.ne.s32.totalorder %s114, %s115
    %p124 = scmp.eq.s32.totalorder %s20, 0
    %p125 = por %p123, %p124
    %p126 = scmp.ne.s32.totalorder %s114, %s115
    %p127 = scmp.eq.s32.totalorder %s21, 1
    %p128 = por %p126, %p127
    %p130 = scmp.ne.s32.totalorder %s115, %s129
    %p131 = scmp.eq.s32.totalorder %s21, 0
    %p132 = por %p130, %p131
    %s134 = sadd.s32 %s133, 1
    %p137 = scmp.eq.s32.totalorder %s15, 1
    %p138 = scmp.ne.s32.totalorder %s133, %s135
    %p139 = scmp.eq.s32.totalorder %s15, 0
    %p140 = por %p138, %p139
    %p141 = scmp.ne.s32.totalorder %s133, %s135
    %p142 = scmp.eq.s32.totalorder %s20, 1
    %p143 = por %p141, %p142
    %p144 = scmp.ne.s32.totalorder %s135, %s136
    %p145 = scmp.eq.s32.totalorder %s20, 0
    %p146 = por %p144, %p145
    %p147 = scmp.ne.s32.totalorder %s135, %s136
    %p148 = scmp.eq.s32.totalorder %s21, 1
    %p149 = por %p147, %p148
    %p151 = scmp.ne.s32.totalorder %s136, %s150
    %p152 = scmp.eq.s32.totalorder %s21, 0
    %p153 = por %p151, %p152
    %s155 = sadd.s32 %s154, 1
    %p158 = scmp.eq.s32.totalorder %s15, 1
    %p159 = scmp.ne.s32.totalorder %s154, %s156
    %p160 = scmp.eq.s32.totalorder %s15, 0
    %p161 = por %p159, %p160
    %p162 = scmp.ne.s32.totalorder %s154, %s156
    %p163 = scmp.eq.s32.totalorder %s20, 1
    %p164 = por %p162, %p163
    %p165 = scmp.ne.s32.totalorder %s156, %s157
    %p166 = scmp.eq.s32.totalorder %s20, 0
    %p167 = por %p165, %p166
    %p168 = scmp.ne.s32.totalorder %s156, %s157
    %p169 = scmp.eq.s32.totalorder %s21, 1
    %p170 = por %p168, %p169
    %p172 = scmp.ne.s32.totalorder %s157, %s171
    %p173 = scmp.eq.s32.totalorder %s21, 0
    %p174 = por %p172, %p173
    %s176 = sadd.s32 %s175, 1
    %p179 = scmp.eq.s32.totalorder %s15, 1
    %p180 = scmp.ne.s32.totalorder %s175, %s177
    %p181 = scmp.eq.s32.totalorder %s15, 0
    %p182 = por %p180, %p181
    %p183 = scmp.ne.s32.totalorder %s175, %s177
    %p184 = scmp.eq.s32.totalorder %s20, 1
    %p185 = por %p183, %p184
    %p186 = scmp.ne.s32.totalorder %s177, %s178
    %p187 = scmp.eq.s32.totalorder %s20, 0
    %p188 = por %p186, %p187
    %p189 = scmp.ne.s32.totalorder %s177, %s178
    %p190 = scmp.eq.s32.totalorder %s21, 1
    %p191 = por %p189, %p190
    %p193 = scmp.ne.s32.totalorder %s178, %s192
    %p194 = scmp.eq.s32.totalorder %s21, 0
    %p195 = por %p193, %p194
    %s197 = sadd.s32 %s196, 1
    %p200 = scmp.eq.s32.totalorder %s15, 1
    %p201 = scmp.ne.s32.totalorder %s196, %s198
    %p202 = scmp.eq.s32.totalorder %s15, 0
    %p203 = por %p201, %p202
    %p204 = scmp.ne.s32.totalorder %s196, %s198
    %p205 = scmp.eq.s32.totalorder %s20, 1
    %p206 = por %p204, %p205
    %p207 = scmp.ne.s32.totalorder %s198, %s199
    %p208 = scmp.eq.s32.totalorder %s20, 0
    %p209 = por %p207, %p208
    %p210 = scmp.ne.s32.totalorder %s198, %s199
    %p211 = scmp.eq.s32.totalorder %s21, 1
    %p212 = por %p210, %p211
    %p214 = scmp.ne.s32.totalorder %s199, %s213
    %p215 = scmp.eq.s32.totalorder %s21, 0
    %p216 = por %p214, %p215
    %s217 = ssub.s32 %s15, %s22
    %p218 = scmp.eq.s32.totalorder %s217, 0
    %s220 = sadd.s32 %s219, 1
    %s221 = scalar_select %p218, %s219, %s220
    %p224 = pneg %p218
    %p225 = scmp.eq.s32.totalorder %s15, 1
    %p226 = por %p224, %p225
    %p227 = scmp.ne.s32.totalorder %s219, %s222
    %p228 = scmp.eq.s32.totalorder %s15, 0
    %p229 = por %p227, %p228
    %p230 = scmp.ne.s32.totalorder %s219, %s222
    %p231 = scmp.eq.s32.totalorder %s20, 1
    %p232 = por %p230, %p231
    %p233 = scmp.ne.s32.totalorder %s222, %s223
    %p234 = scmp.eq.s32.totalorder %s20, 0
    %p235 = por %p233, %p234
    %p236 = scmp.ne.s32.totalorder %s222, %s223
    %p237 = scmp.eq.s32.totalorder %s21, 1
    %p238 = por %p236, %p237
    %p240 = scmp.ne.s32.totalorder %s223, %s239
    %p241 = scmp.eq.s32.totalorder %s21, 0
    %p242 = por %p240, %p241
    %p243 = scmp.le.s32.totalorder 1, %s15
    %p244 = scmp.lt.s32.totalorder %s15, 3
    %p245 = pnand %p243, %p244
    %p246 = pneg %p245
    // Predicated region
    $region9: #{bottleneck_forward.1} parent=5 // pred_check
      _
    $region10: #{bottleneck_forward.1} parent=5 // pred_check_branch
      %248 = sbr.rel (%p245) target = $region12
    $region11: #{bottleneck_forward.1} parent=5 // pred_region
      %s249 = ssub.s32 %s15, 1
      // Predicated region
      $region13: #{bottleneck_forward.1} parent=11 // pred_check
        %p250 = pneg %p62
      $region14: #{bottleneck_forward.1} parent=11 // pred_check_branch
        %252 = sbr.rel (%p250) target = $region16
      $region15: #{bottleneck_forward.1} parent=11 // pred_region
        _
      $region16: #{bottleneck_forward.1} parent=11 // pred_fallthru
        _
      // Predicated region
      $region17: #{bottleneck_forward.1} parent=11 // pred_check
        %p253 = pneg %p83
      $region18: #{bottleneck_forward.1} parent=11 // pred_check_branch
        %255 = sbr.rel (%p253) target = $region20
      $region19: #{bottleneck_forward.1} parent=11 // pred_region
        _
      $region20: #{bottleneck_forward.1} parent=11 // pred_fallthru
        _
      // Predicated region
      $region21: #{bottleneck_forward.1} parent=11 // pred_check
        %p256 = pneg %p104
      $region22: #{bottleneck_forward.1} parent=11 // pred_check_branch
        %258 = sbr.rel (%p256) target = $region24
      $region23: #{bottleneck_forward.1} parent=11 // pred_region
        _
      $region24: #{bottleneck_forward.1} parent=11 // pred_fallthru
        _
      // Predicated region
      $region25: #{bottleneck_forward.1} parent=11 // pred_check
        %p259 = pneg %p125
      $region26: #{bottleneck_forward.1} parent=11 // pred_check_branch
        %261 = sbr.rel (%p259) target = $region28
      $region27: #{bottleneck_forward.1} parent=11 // pred_region
        _
      $region28: #{bottleneck_forward.1} parent=11 // pred_fallthru
        _
      // Predicated region
      $region29: #{bottleneck_forward.1} parent=11 // pred_check
        %p262 = pneg %p146
      $region30: #{bottleneck_forward.1} parent=11 // pred_check_branch
        %264 = sbr.rel (%p262) target = $region32
      $region31: #{bottleneck_forward.1} parent=11 // pred_region
        _
      $region32: #{bottleneck_forward.1} parent=11 // pred_fallthru
        _
      // Predicated region
      $region33: #{bottleneck_forward.1} parent=11 // pred_check
        %p265 = pneg %p167
      $region34: #{bottleneck_forward.1} parent=11 // pred_check_branch
        %267 = sbr.rel (%p265) target = $region36
      $region35: #{bottleneck_forward.1} parent=11 // pred_region
        _
      $region36: #{bottleneck_forward.1} parent=11 // pred_fallthru
        _
      // Predicated region
      $region37: #{bottleneck_forward.1} parent=11 // pred_check
        %p268 = pneg %p188
      $region38: #{bottleneck_forward.1} parent=11 // pred_check_branch
        %270 = sbr.rel (%p268) target = $region40
      $region39: #{bottleneck_forward.1} parent=11 // pred_region
        _
      $region40: #{bottleneck_forward.1} parent=11 // pred_fallthru
        _
      // Predicated region
      $region41: #{bottleneck_forward.1} parent=11 // pred_check
        %p271 = pneg %p209
      $region42: #{bottleneck_forward.1} parent=11 // pred_check_branch
        %273 = sbr.rel (%p271) target = $region44
      $region43: #{bottleneck_forward.1} parent=11 // pred_region
        _
      $region44: #{bottleneck_forward.1} parent=11 // pred_fallthru
        _
    $region12: #{bottleneck_forward.1} parent=5 // pred_fallthru
      _
    %p274 = scmp.lt.s32.totalorder %s15, 2
    // Predicated region
    $region45: #{bottleneck_forward.1} parent=5 // pred_check
      %p275 = pneg %p274
    $region46: #{bottleneck_forward.1} parent=5 // pred_check_branch
      %277 = sbr.rel (%p275) target = $region48
    $region47: #{bottleneck_forward.1} parent=5 // pred_region
      // Predicated region
      $region49: #{bottleneck_forward.1} parent=47 // pred_check
        %p278 = pneg %p35
      $region50: #{bottleneck_forward.1} parent=47 // pred_check_branch
        %280 = sbr.rel (%p278) target = $region52
      $region51: #{bottleneck_forward.1} parent=47 // pred_region
        %p281 = scmp.lt.s32.totalorder %s15, 1
        %s282 = scalar_select %p281, %s15, 1
        %s283 = smul.addr %s282, 32
        %s284 = smul.addr %s283, 4
        %s285 = scalar_lea.vmem %s0, %s284
      $region52: #{bottleneck_forward.1} parent=47 // pred_fallthru
        _
    $region48: #{bottleneck_forward.1} parent=5 // pred_fallthru
      _
    %p286 = scmp.le.s32.totalorder 1, %s15
    %p287 = scmp.lt.s32.totalorder %s15, 3
    %p288 = pnand %p286, %p287
    %p289 = pneg %p288
    // Predicated region
    $region53: #{bottleneck_forward.1} parent=5 // pred_check
      _
    $region54: #{bottleneck_forward.1} parent=5 // pred_check_branch
      %291 = sbr.rel (%p288) target = $region56
    $region55: #{bottleneck_forward.1} parent=5 // pred_region
      %s292 = ssub.s32 %s15, 1
      %p293 = scmp.lt.s32.totalorder %s20, 1
      %s294 = scalar_select %p293, %s20, 1
      %s295 = smul.addr %s294, 32
      %s296 = smul.addr %s295, 4
      %s297 = scalar_lea.vmem %s0, %s296
      %p298 = pneg %p41
      %p299 = pneg %p38
      %p300 = pneg %p62
      %p301 = pneg %p59
      %p302 = pneg %p83
      %p303 = pneg %p80
      %p304 = pneg %p104
      %p305 = pneg %p101
      %p306 = pneg %p125
      %p307 = pneg %p122
      %p308 = pneg %p146
      %p309 = pneg %p143
      %p310 = pneg %p167
      %p311 = pneg %p164
      %p312 = pneg %p188
      %p313 = pneg %p185
      %p314 = pneg %p209
      %p315 = pneg %p206
      %p316 = pneg %p235
      %p317 = pneg %p232
      %p318 = scmp.lt.s32.totalorder %s20, 1
      %s319 = scalar_select %p318, %s20, 1
      %s320 = smul.addr %s319, 8
      %s321 = smul.addr %s320, 8
      %s322 = scalar_lea.vmem %s9, %s321
      %p323 = scmp.lt.s32.totalorder %s20, 1
      %s324 = scalar_select %p323, %s20, 1
      %s325 = smul.addr %s324, 32
      %s326 = smul.addr %s325, 4
      %s327 = scalar_lea.vmem %s0, %s326
      %p328 = scmp.lt.s32.totalorder %s20, 1
      %s329 = scalar_select %p328, %s20, 1
      %s330 = smul.addr %s329, 8
      %s331 = smul.addr %s330, 8
      %s332 = scalar_lea.vmem %s9, %s331
      %334 = vst [vmem:[#allocation2] sm:$0xff] 0.0
      %335 = vst [vmem:[#allocation2 + $0x8] sm:$0xff] 0.0
      %336 = vst [vmem:[#allocation2 + $0x10] sm:$0xff] 0.0
      %337 = vst [vmem:[#allocation2 + $0x18] sm:$0xff] 0.0
      %338 = vst [vmem:[#allocation2 + $0x20] sm:$0xff] 0.0
      %339 = vst [vmem:[#allocation2 + $0x28] sm:$0xff] 0.0
      %340 = vst [vmem:[#allocation2 + $0x30] sm:$0xff] 0.0
      %341 = vst [vmem:[#allocation2 + $0x38] sm:$0xff] 0.0
      %342 = vst [vmem:[#allocation2 + $0x40] sm:$0xff] 0.0
      %343 = vst [vmem:[#allocation2 + $0x48] sm:$0xff] 0.0
      %344 = vst [vmem:[#allocation2 + $0x50] sm:$0xff] 0.0
      %345 = vst [vmem:[#allocation2 + $0x58] sm:$0xff] 0.0
      %346 = vst [vmem:[#allocation2 + $0x60] sm:$0xff] 0.0
      %347 = vst [vmem:[#allocation2 + $0x68] sm:$0xff] 0.0
      %348 = vst [vmem:[#allocation2 + $0x70] sm:$0xff] 0.0
      %349 = vst [vmem:[#allocation2 + $0x78] sm:$0xff] 0.0
      %350 = vst [vmem:[#allocation2 + $0x80] sm:$0xff] 0.0
      %351 = vst [vmem:[#allocation2 + $0x88] sm:$0xff] 0.0
      %352 = vst [vmem:[#allocation2 + $0x90] sm:$0xff] 0.0
      %353 = vst [vmem:[#allocation2 + $0x98] sm:$0xff] 0.0
      %354 = vst [vmem:[#allocation2 + $0xa0] sm:$0xff] 0.0
      %355 = vst [vmem:[#allocation2 + $0xa8] sm:$0xff] 0.0
      %356 = vst [vmem:[#allocation2 + $0xb0] sm:$0xff] 0.0
      %357 = vst [vmem:[#allocation2 + $0xb8] sm:$0xff] 0.0
      %358 = vst [vmem:[#allocation2 + $0xc0] sm:$0xff] 0.0
      %359 = vst [vmem:[#allocation2 + $0xc8] sm:$0xff] 0.0
      %360 = vst [vmem:[#allocation2 + $0xd0] sm:$0xff] 0.0
      %361 = vst [vmem:[#allocation2 + $0xd8] sm:$0xff] 0.0
      %362 = vst [vmem:[#allocation2 + $0xe0] sm:$0xff] 0.0
      %363 = vst [vmem:[#allocation2 + $0xe8] sm:$0xff] 0.0
      %364 = vst [vmem:[#allocation2 + $0xf0] sm:$0xff] 0.0
      %365 = vst [vmem:[#allocation2 + $0xf8] sm:$0xff] 0.0
      %366 = vst [vmem:[#allocation2 + $0x100] sm:$0xff] 0.0
      %367 = vst [vmem:[#allocation2 + $0x108] sm:$0xff] 0.0
      %368 = vst [vmem:[#allocation2 + $0x110] sm:$0xff] 0.0
      %369 = vst [vmem:[#allocation2 + $0x118] sm:$0xff] 0.0
      %370 = vst [vmem:[#allocation2 + $0x120] sm:$0xff] 0.0
      %371 = vst [vmem:[#allocation2 + $0x128] sm:$0xff] 0.0
      %372 = vst [vmem:[#allocation2 + $0x130] sm:$0xff] 0.0
      %373 = vst [vmem:[#allocation2 + $0x138] sm:$0xff] 0.0
      %374 = vst [vmem:[#allocation2 + $0x140] sm:$0xff] 0.0
      %375 = vst [vmem:[#allocation2 + $0x148] sm:$0xff] 0.0
      %376 = vst [vmem:[#allocation2 + $0x150] sm:$0xff] 0.0
      %377 = vst [vmem:[#allocation2 + $0x158] sm:$0xff] 0.0
      %378 = vst [vmem:[#allocation2 + $0x160] sm:$0xff] 0.0
      %379 = vst [vmem:[#allocation2 + $0x168] sm:$0xff] 0.0
      %380 = vst [vmem:[#allocation2 + $0x170] sm:$0xff] 0.0
      %381 = vst [vmem:[#allocation2 + $0x178] sm:$0xff] 0.0
      %382 = vst [vmem:[#allocation2 + $0x180] sm:$0xff] 0.0
      %383 = vst [vmem:[#allocation2 + $0x188] sm:$0xff] 0.0
      %384 = vst [vmem:[#allocation2 + $0x190] sm:$0xff] 0.0
      %385 = vst [vmem:[#allocation2 + $0x198] sm:$0xff] 0.0
      %386 = vst [vmem:[#allocation2 + $0x1a0] sm:$0xff] 0.0
      %387 = vst [vmem:[#allocation2 + $0x1a8] sm:$0xff] 0.0
      %388 = vst [vmem:[#allocation2 + $0x1b0] sm:$0xff] 0.0
      %389 = vst [vmem:[#allocation2 + $0x1b8] sm:$0xff] 0.0
      %390 = vst [vmem:[#allocation2 + $0x1c0] sm:$0xff] 0.0
      %391 = vst [vmem:[#allocation2 + $0x1c8] sm:$0xff] 0.0
      %392 = vst [vmem:[#allocation2 + $0x1d0] sm:$0xff] 0.0
      %393 = vst [vmem:[#allocation2 + $0x1d8] sm:$0xff] 0.0
      %394 = vst [vmem:[#allocation2 + $0x1e0] sm:$0xff] 0.0
      %395 = vst [vmem:[#allocation2 + $0x1e8] sm:$0xff] 0.0
      %396 = vst [vmem:[#allocation2 + $0x1f0] sm:$0xff] 0.0
      %397 = vst [vmem:[#allocation2 + $0x1f8] sm:$0xff] 0.0
      %398 = vst [vmem:[#allocation2 + $0x200] sm:$0xff] 0.0
      %399 = vst [vmem:[#allocation2 + $0x208] sm:$0xff] 0.0
      %400 = vst [vmem:[#allocation2 + $0x210] sm:$0xff] 0.0
      %401 = vst [vmem:[#allocation2 + $0x218] sm:$0xff] 0.0
      %402 = vst [vmem:[#allocation2 + $0x220] sm:$0xff] 0.0
      %403 = vst [vmem:[#allocation2 + $0x228] sm:$0xff] 0.0
      %404 = vst [vmem:[#allocation2 + $0x230] sm:$0xff] 0.0
      %405 = vst [vmem:[#allocation2 + $0x238] sm:$0xff] 0.0
      %v406 = vld [vmem:[%s327] sm:$0xf]
      %v407 = vld [vmem:[%s327 + $0x8] sm:$0xf]
      %v408 = vld [vmem:[%s327 + $0x10] sm:$0xf]
      %v409 = vld [vmem:[%s327 + $0x18] sm:$0xf]
      %v410 = vld [vmem:[%s327 + $0x20] sm:$0xf]
      %v411 = vld [vmem:[%s327 + $0x28] sm:$0xf]
      %v412 = vld [vmem:[%s327 + $0x30] sm:$0xf]
      %v413 = vld [vmem:[%s327 + $0x38] sm:$0xf]
      %v414 = vld [vmem:[%s327 + $0x40] sm:$0xf]
      %v415 = vld [vmem:[%s327 + $0x48] sm:$0xf]
      %v416 = vld [vmem:[%s327 + $0x50] sm:$0xf]
      %v417 = vld [vmem:[%s327 + $0x58] sm:$0xf]
      %v418 = vld [vmem:[%s327 + $0x60] sm:$0xf]
      %v419 = vld [vmem:[%s327 + $0x68] sm:$0xf]
      %v420 = vld [vmem:[%s327 + $0x70] sm:$0xf]
      %v421 = vld [vmem:[%s327 + $0x78] sm:$0xf]
      %v422 = vunpack.c.l.bf16 %v406
      %v423 = vunpack.c.l.bf16 %v407
      %v424 = vunpack.c.l.bf16 %v408
      %v425 = vunpack.c.l.bf16 %v409
      %v426 = vunpack.c.l.bf16 %v410
      %v427 = vunpack.c.l.bf16 %v411
      %v428 = vunpack.c.l.bf16 %v412
      %v429 = vunpack.c.l.bf16 %v413
      %v430 = vunpack.c.l.bf16 %v414
      %v431 = vunpack.c.l.bf16 %v415
      %v432 = vunpack.c.l.bf16 %v416
      %v433 = vunpack.c.l.bf16 %v417
      %v434 = vunpack.c.l.bf16 %v418
      %v435 = vunpack.c.l.bf16 %v419
      %v436 = vunpack.c.l.bf16 %v420
      %v437 = vunpack.c.l.bf16 %v421
      %v438 = vpack.c.bf16 %v423, %v422
      %v439 = vpack.c.bf16 %v425, %v424
      %v440 = vpack.c.bf16 %v427, %v426
      %v441 = vpack.c.bf16 %v429, %v428
      %v442 = vpack.c.bf16 %v431, %v430
      %v443 = vpack.c.bf16 %v433, %v432
      %v444 = vpack.c.bf16 %v435, %v434
      %v445 = vpack.c.bf16 %v437, %v436
      %v446 = vld [vmem:[%s1] sm:$0xf]
      %v447 = vld [vmem:[%s1 + $0x4] sm:$0xf]
      %v448 = vld [vmem:[%s1 + $0x8] sm:$0xf]
      %v449 = vld [vmem:[%s1 + $0xc] sm:$0xf]
      %v450 = vld [vmem:[%s1 + $0x10] sm:$0xf]
      %v451 = vld [vmem:[%s1 + $0x14] sm:$0xf]
      %v452 = vld [vmem:[%s1 + $0x18] sm:$0xf]
      %v453 = vld [vmem:[%s1 + $0x1c] sm:$0xf]
      %v454 = vld [vmem:[%s1 + $0x20] sm:$0xf]
      %v455 = vld [vmem:[%s1 + $0x24] sm:$0xf]
      %v456 = vld [vmem:[%s1 + $0x28] sm:$0xf]
      %v457 = vld [vmem:[%s1 + $0x2c] sm:$0xf]
      %v458 = vld [vmem:[%s1 + $0x30] sm:$0xf]
      %v459 = vld [vmem:[%s1 + $0x34] sm:$0xf]
      %v460 = vld [vmem:[%s1 + $0x38] sm:$0xf]
      %v461 = vld [vmem:[%s1 + $0x3c] sm:$0xf]
      %v462 = vld [vmem:[%s2] sm:$0x1]
      %v464 = vlaneseq
      %v465 = vshrl.u32 %v464, 7
      %v466 = vsub.s32 0, %v465
      %v467 = vrot.slane %v462, %v466
      %v485 = vunpack.c.l.b16 %v446
      %v486 = vunpack.c.l.b16 %v447
      %v487 = vunpack.c.l.b16 %v448
      %v488 = vunpack.c.l.b16 %v449
      %v489 = vunpack.c.l.b16 %v450
      %v490 = vunpack.c.l.b16 %v451
      %v491 = vunpack.c.l.b16 %v452
      %v492 = vunpack.c.l.b16 %v453
      %v493 = vunpack.c.l.b16 %v454
      %v494 = vunpack.c.l.b16 %v455
      %v495 = vunpack.c.l.b16 %v456
      %v496 = vunpack.c.l.b16 %v457
      %v497 = vunpack.c.l.b16 %v458
      %v498 = vunpack.c.l.b16 %v459
      %v499 = vunpack.c.l.b16 %v460
      %v500 = vunpack.c.l.b16 %v461
      %v501 = vpack.c.b16 %v486, %v485
      %v502 = vpack.c.b16 %v488, %v487
      %v503 = vpack.c.b16 %v490, %v489
      %v504 = vpack.c.b16 %v492, %v491
      %v505 = vpack.c.b16 %v494, %v493
      %v506 = vpack.c.b16 %v496, %v495
      %v507 = vpack.c.b16 %v498, %v497
      %v508 = vpack.c.b16 %v500, %v499
      %517 = vmatprep.subr.bf16.mxu0 0
      %518 = vmatpush1.bf16.msra.mxu0 %v501
      %519 = vmatprep.subr.bf16.mxu0 0
      %520 = vmatpush1.bf16.msra.mxu0 %v502
      %521 = vmatprep.subr.bf16.mxu0 0
      %522 = vmatpush1.bf16.msra.mxu0 %v503
      %523 = vmatprep.subr.bf16.mxu0 0
      %524 = vmatpush1.bf16.msra.mxu0 %v504
      %525 = vmatprep.subr.bf16.mxu0 0
      %526 = vmatpush1.bf16.msra.mxu0 %v505
      %527 = vmatprep.subr.bf16.mxu0 0
      %528 = vmatpush1.bf16.msra.mxu0 %v506
      %529 = vmatprep.subr.bf16.mxu0 0
      %530 = vmatpush1.bf16.msra.mxu0 %v507
      %531 = vmatprep.subr.bf16.mxu0 0
      %532 = vmatpush1.bf16.msra.mxu0 %v508
      %533 = vmatprep.subr.bf16.mxu0 0
      %534 = vmatpush1.bf16.msra.mxu0 0
      %535 = vmatprep.subr.bf16.mxu0 0
      %536 = vmatpush1.bf16.msra.mxu0 0
      %537 = vmatprep.subr.bf16.mxu0 0
      %538 = vmatpush1.bf16.msra.mxu0 0
      %539 = vmatprep.subr.bf16.mxu0 0
      %540 = vmatpush1.bf16.msra.mxu0 0
      %541 = vmatprep.subr.bf16.mxu0 0
      %542 = vmatpush1.bf16.msra.mxu0 0
      %543 = vmatprep.subr.bf16.mxu0 0
      %544 = vmatpush1.bf16.msra.mxu0 0
      %545 = vmatprep.subr.bf16.mxu0 0
      %546 = vmatpush1.bf16.msra.mxu0 0
      %547 = vmatprep.subr.bf16.mxu0 0
      %548 = vmatpush1.bf16.msra.mxu0 0
      %549 = vmatprep.mubr.bf16.mxu0 0
      %550 = vmatmul.mubr.bf16.gmra.mrb[0].mxu0 %v438
      %v551 = vpop.f32.mrb[0].mxu0
      %v552 = vadd.f32 %v467, %v551
      %v553 = vpop.f32.mrb[0].mxu0
      %v554 = vpop.f32.mrb[0].mxu0
      %v555 = vadd.f32 %v467, %v554
      %v556 = vpop.f32.mrb[0].mxu0
      %557 = vmatprep.mubr.bf16.mxu0 0
      %558 = vmatmul.mubr.bf16.gmra.mrb[0].mxu0 %v439
      %v559 = vpop.f32.mrb[0].mxu0
      %v560 = vadd.f32 %v467, %v559
      %v561 = vpop.f32.mrb[0].mxu0
      %v562 = vpop.f32.mrb[0].mxu0
      %v563 = vadd.f32 %v467, %v562
      %v564 = vpop.f32.mrb[0].mxu0
      %565 = vmatprep.mubr.bf16.mxu0 0
      %566 = vmatmul.mubr.bf16.gmra.mrb[0].mxu0 %v440
      %v567 = vpop.f32.mrb[0].mxu0
      %v568 = vadd.f32 %v467, %v567
      %v569 = vpop.f32.mrb[0].mxu0
      %v570 = vpop.f32.mrb[0].mxu0
      %v571 = vadd.f32 %v467, %v570
      %v572 = vpop.f32.mrb[0].mxu0
      %573 = vmatprep.mubr.bf16.mxu0 0
      %574 = vmatmul.mubr.bf16.gmra.mrb[0].mxu0 %v441
      %v575 = vpop.f32.mrb[0].mxu0
      %v576 = vadd.f32 %v467, %v575
      %v577 = vpop.f32.mrb[0].mxu0
      %v578 = vpop.f32.mrb[0].mxu0
      %v579 = vadd.f32 %v467, %v578
      %v580 = vpop.f32.mrb[0].mxu0
      %581 = vmatprep.mubr.bf16.mxu0 0
      %582 = vmatmul.mubr.bf16.gmra.mrb[0].mxu0 %v442
      %v583 = vpop.f32.mrb[0].mxu0
      %v584 = vadd.f32 %v467, %v583
      %v585 = vpop.f32.mrb[0].mxu0
      %v586 = vpop.f32.mrb[0].mxu0
      %v587 = vadd.f32 %v467, %v586
      %v588 = vpop.f32.mrb[0].mxu0
      %589 = vmatprep.mubr.bf16.mxu0 0
      %590 = vmatmul.mubr.bf16.gmra.mrb[0].mxu0 %v443
      %v591 = vpop.f32.mrb[0].mxu0
      %v592 = vadd.f32 %v467, %v591
      %v593 = vpop.f32.mrb[0].mxu0
      %v594 = vpop.f32.mrb[0].mxu0
      %v595 = vadd.f32 %v467, %v594
      %v596 = vpop.f32.mrb[0].mxu0
      %597 = vmatprep.mubr.bf16.mxu0 0
      %598 = vmatmul.mubr.bf16.gmra.mrb[0].mxu0 %v444
      %v599 = vpop.f32.mrb[0].mxu0
      %v600 = vadd.f32 %v467, %v599
      %v601 = vpop.f32.mrb[0].mxu0
      %v602 = vpop.f32.mrb[0].mxu0
      %v603 = vadd.f32 %v467, %v602
      %v604 = vpop.f32.mrb[0].mxu0
      %605 = vmatprep.mubr.bf16.mxu0 0
      %606 = vmatmul.mubr.bf16.gmra.mrb[0].mxu0 %v445
      %v607 = vpop.f32.mrb[0].mxu0
      %v608 = vadd.f32 %v467, %v607
      %v609 = vpop.f32.mrb[0].mxu0
      %v610 = vpop.f32.mrb[0].mxu0
      %v611 = vadd.f32 %v467, %v610
      %v612 = vpop.f32.mrb[0].mxu0
      %613 = vdwg.mxu0
      %v614 = vmax.f32 %v552, 0.0
      %v615 = vmax.f32 %v555, 0.0
      %v616 = vmax.f32 %v560, 0.0
      %v617 = vmax.f32 %v563, 0.0
      %v618 = vmax.f32 %v568, 0.0
      %v619 = vmax.f32 %v571, 0.0
      %v620 = vmax.f32 %v576, 0.0
      %v621 = vmax.f32 %v579, 0.0
      %v622 = vmax.f32 %v584, 0.0
      %v623 = vmax.f32 %v587, 0.0
      %v624 = vmax.f32 %v592, 0.0
      %v625 = vmax.f32 %v595, 0.0
      %v626 = vmax.f32 %v600, 0.0
      %v627 = vmax.f32 %v603, 0.0
      %v628 = vmax.f32 %v608, 0.0
      %v629 = vmax.f32 %v611, 0.0
      %s630 = scalar_lea.vmem [#allocation2], 32
      %631 = vst [vmem:[%s630 + $0x8] sm:$0xff] %v614
      %632 = vst [vmem:[%s630 + $0x28] sm:$0xff] %v615
      %633 = vst [vmem:[%s630 + $0x48] sm:$0xff] %v616
      %634 = vst [vmem:[%s630 + $0x68] sm:$0xff] %v617
      %635 = vst [vmem:[%s630 + $0x88] sm:$0xff] %v618
      %636 = vst [vmem:[%s630 + $0xa8] sm:$0xff] %v619
      %637 = vst [vmem:[%s630 + $0xc8] sm:$0xff] %v620
      %638 = vst [vmem:[%s630 + $0xe8] sm:$0xff] %v621
      %639 = vst [vmem:[%s630 + $0x108] sm:$0xff] %v622
      %640 = vst [vmem:[%s630 + $0x128] sm:$0xff] %v623
      %641 = vst [vmem:[%s630 + $0x148] sm:$0xff] %v624
      %642 = vst [vmem:[%s630 + $0x168] sm:$0xff] %v625
      %643 = vst [vmem:[%s630 + $0x188] sm:$0xff] %v626
      %644 = vst [vmem:[%s630 + $0x1a8] sm:$0xff] %v627
      %645 = vst [vmem:[%s630 + $0x1c8] sm:$0xff] %v628
      %646 = vst [vmem:[%s630 + $0x1e8] sm:$0xff] %v629
      %s647 = scalar_lea.vmem %s327, 4
      %v648 = vld [vmem:[%s647] sm:$0xf]
      %v649 = vld [vmem:[%s647 + $0x8] sm:$0xf]
      %v650 = vld [vmem:[%s647 + $0x10] sm:$0xf]
      %v651 = vld [vmem:[%s647 + $0x18] sm:$0xf]
      %v652 = vld [vmem:[%s647 + $0x20] sm:$0xf]
      %v653 = vld [vmem:[%s647 + $0x28] sm:$0xf]
      %v654 = vld [vmem:[%s647 + $0x30] sm:$0xf]
      %v655 = vld [vmem:[%s647 + $0x38] sm:$0xf]
      %v656 = vld [vmem:[%s647 + $0x40] sm:$0xf]
      %v657 = vld [vmem:[%s647 + $0x48] sm:$0xf]
      %v658 = vld [vmem:[%s647 + $0x50] sm:$0xf]
      %v659 = vld [vmem:[%s647 + $0x58] sm:$0xf]
      %v660 = vld [vmem:[%s647 + $0x60] sm:$0xf]
      %v661 = vld [vmem:[%s647 + $0x68] sm:$0xf]
      %v662 = vld [vmem:[%s647 + $0x70] sm:$0xf]
      %v663 = vld [vmem:[%s647 + $0x78] sm:$0xf]
      %v664 = vunpack.c.l.bf16 %v648
      %v665 = vunpack.c.l.bf16 %v649
      %v666 = vunpack.c.l.bf16 %v650
      %v667 = vunpack.c.l.bf16 %v651
      %v668 = vunpack.c.l.bf16 %v652
      %v669 = vunpack.c.l.bf16 %v653
      %v670 = vunpack.c.l.bf16 %v654
      %v671 = vunpack.c.l.bf16 %v655
      %v672 = vunpack.c.l.bf16 %v656
      %v673 = vunpack.c.l.bf16 %v657
      %v674 = vunpack.c.l.bf16 %v658
      %v675 = vunpack.c.l.bf16 %v659
      %v676 = vunpack.c.l.bf16 %v660
      %v677 = vunpack.c.l.bf16 %v661
      %v678 = vunpack.c.l.bf16 %v662
      %v679 = vunpack.c.l.bf16 %v663
      %v680 = vpack.c.bf16 %v665, %v664
      %v681 = vpack.c.bf16 %v667, %v666
      %v682 = vpack.c.bf16 %v669, %v668
      %v683 = vpack.c.bf16 %v671, %v670
      %v684 = vpack.c.bf16 %v673, %v672
      %v685 = vpack.c.bf16 %v675, %v674
      %v686 = vpack.c.bf16 %v677, %v676
      %v687 = vpack.c.bf16 %v679, %v678
      %v688 = vld [vmem:[%s1] sm:$0xf]
      %v689 = vld [vmem:[%s1 + $0x4] sm:$0xf]
      %v690 = vld [vmem:[%s1 + $0x8] sm:$0xf]
      %v691 = vld [vmem:[%s1 + $0xc] sm:$0xf]
      %v692 = vld [vmem:[%s1 + $0x10] sm:$0xf]
      %v693 = vld [vmem:[%s1 + $0x14] sm:$0xf]
      %v694 = vld [vmem:[%s1 + $0x18] sm:$0xf]
      %v695 = vld [vmem:[%s1 + $0x1c] sm:$0xf]
      %v696 = vld [vmem:[%s1 + $0x20] sm:$0xf]
      %v697 = vld [vmem:[%s1 + $0x24] sm:$0xf]
      %v698 = vld [vmem:[%s1 + $0x28] sm:$0xf]
      %v699 = vld [vmem:[%s1 + $0x2c] sm:$0xf]
      %v700 = vld [vmem:[%s1 + $0x30] sm:$0xf]
      %v701 = vld [vmem:[%s1 + $0x34] sm:$0xf]
      %v702 = vld [vmem:[%s1 + $0x38] sm:$0xf]
      %v703 = vld [vmem:[%s1 + $0x3c] sm:$0xf]
      %v704 = vld [vmem:[%s2] sm:$0x1]
      %v706 = vlaneseq
      %v707 = vshrl.u32 %v706, 7
      %v708 = vsub.s32 0, %v707
      %v709 = vrot.slane %v704, %v708
      %v727 = vunpack.c.l.b16 %v688
      %v728 = vunpack.c.l.b16 %v689
      %v729 = vunpack.c.l.b16 %v690
      %v730 = vunpack.c.l.b16 %v691
      %v731 = vunpack.c.l.b16 %v692
      %v732 = vunpack.c.l.b16 %v693
      %v733 = vunpack.c.l.b16 %v694
      %v734 = vunpack.c.l.b16 %v695
      %v735 = vunpack.c.l.b16 %v696
      %v736 = vunpack.c.l.b16 %v697
      %v737 = vunpack.c.l.b16 %v698
      %v738 = vunpack.c.l.b16 %v699
      %v739 = vunpack.c.l.b16 %v700
      %v740 = vunpack.c.l.b16 %v701
      %v741 = vunpack.c.l.b16 %v702
      %v742 = vunpack.c.l.b16 %v703
      %v743 = vpack.c.b16 %v728, %v727
      %v744 = vpack.c.b16 %v730, %v729
      %v745 = vpack.c.b16 %v732, %v731
      %v746 = vpack.c.b16 %v734, %v733
      %v747 = vpack.c.b16 %v736, %v735
      %v748 = vpack.c.b16 %v738, %v737
      %v749 = vpack.c.b16 %v740, %v739
      %v750 = vpack.c.b16 %v742, %v741
      %759 = vmatprep.subr.bf16.mxu0 0
      %760 = vmatpush1.bf16.msra.mxu0 %v743
      %761 = vmatprep.subr.bf16.mxu0 0
      %762 = vmatpush1.bf16.msra.mxu0 %v744
      %763 = vmatprep.subr.bf16.mxu0 0
      %764 = vmatpush1.bf16.msra.mxu0 %v745
      %765 = vmatprep.subr.bf16.mxu0 0
      %766 = vmatpush1.bf16.msra.mxu0 %v746
      %767 = vmatprep.subr.bf16.mxu0 0
      %768 = vmatpush1.bf16.msra.mxu0 %v747
      %769 = vmatprep.subr.bf16.mxu0 0
      %770 = vmatpush1.bf16.msra.mxu0 %v748
      %771 = vmatprep.subr.bf16.mxu0 0
      %772 = vmatpush1.bf16.msra.mxu0 %v749
      %773 = vmatprep.subr.bf16.mxu0 0
      %774 = vmatpush1.bf16.msra.mxu0 %v750
      %775 = vmatprep.subr.bf16.mxu0 0
      %776 = vmatpush1.bf16.msra.mxu0 0
      %777 = vmatprep.subr.bf16.mxu0 0
      %778 = vmatpush1.bf16.msra.mxu0 0
      %779 = vmatprep.subr.bf16.mxu0 0
      %780 = vmatpush1.bf16.msra.mxu0 0
      %781 = vmatprep.subr.bf16.mxu0 0
      %782 = vmatpush1.bf16.msra.mxu0 0
      %783 = vmatprep.subr.bf16.mxu0 0
      %784 = vmatpush1.bf16.msra.mxu0 0
      %785 = vmatprep.subr.bf16.mxu0 0
      %786 = vmatpush1.bf16.msra.mxu0 0
      %787 = vmatprep.subr.bf16.mxu0 0
      %788 = vmatpush1.bf16.msra.mxu0 0
      %789 = vmatprep.subr.bf16.mxu0 0
      %790 = vmatpush1.bf16.msra.mxu0 0
      %791 = vmatprep.mubr.bf16.mxu0 0
      %792 = vmatmul.mubr.bf16.gmra.mrb[0].mxu0 %v680
      %v793 = vpop.f32.mrb[0].mxu0
      %v794 = vadd.f32 %v709, %v793
      %v795 = vpop.f32.mrb[0].mxu0
      %v796 = vpop.f32.mrb[0].mxu0
      %v797 = vadd.f32 %v709, %v796
      %v798 = vpop.f32.mrb[0].mxu0
      %799 = vmatprep.mubr.bf16.mxu0 0
      %800 = vmatmul.mubr.bf16.gmra.mrb[0].mxu0 %v681
      %v801 = vpop.f32.mrb[0].mxu0
      %v802 = vadd.f32 %v709, %v801
      %v803 = vpop.f32.mrb[0].mxu0
      %v804 = vpop.f32.mrb[0].mxu0
      %v805 = vadd.f32 %v709, %v804
      %v806 = vpop.f32.mrb[0].mxu0
      %807 = vmatprep.mubr.bf16.mxu0 0
      %808 = vmatmul.mubr.bf16.gmra.mrb[0].mxu0 %v682
      %v809 = vpop.f32.mrb[0].mxu0
      %v810 = vadd.f32 %v709, %v809
      %v811 = vpop.f32.mrb[0].mxu0
      %v812 = vpop.f32.mrb[0].mxu0
      %v813 = vadd.f32 %v709, %v812
      %v814 = vpop.f32.mrb[0].mxu0
      %815 = vmatprep.mubr.bf16.mxu0 0
      %816 = vmatmul.mubr.bf16.gmra.mrb[0].mxu0 %v683
      %v817 = vpop.f32.mrb[0].mxu0
      %v818 = vadd.f32 %v709, %v817
      %v819 = vpop.f32.mrb[0].mxu0
      %v820 = vpop.f32.mrb[0].mxu0
      %v821 = vadd.f32 %v709, %v820
      %v822 = vpop.f32.mrb[0].mxu0
      %823 = vmatprep.mubr.bf16.mxu0 0
      %824 = vmatmul.mubr.bf16.gmra.mrb[0].mxu0 %v684
      %v825 = vpop.f32.mrb[0].mxu0
      %v826 = vadd.f32 %v709, %v825
      %v827 = vpop.f32.mrb[0].mxu0
      %v828 = vpop.f32.mrb[0].mxu0
      %v829 = vadd.f32 %v709, %v828
      %v830 = vpop.f32.mrb[0].mxu0
      %831 = vmatprep.mubr.bf16.mxu0 0
      %832 = vmatmul.mubr.bf16.gmra.mrb[0].mxu0 %v685
      %v833 = vpop.f32.mrb[0].mxu0
      %v834 = vadd.f32 %v709, %v833
      %v835 = vpop.f32.mrb[0].mxu0
      %v836 = vpop.f32.mrb[0].mxu0
      %v837 = vadd.f32 %v709, %v836
      %v838 = vpop.f32.mrb[0].mxu0
      %839 = vmatprep.mubr.bf16.mxu0 0
      %840 = vmatmul.mubr.bf16.gmra.mrb[0].mxu0 %v686
      %v841 = vpop.f32.mrb[0].mxu0
      %v842 = vadd.f32 %v709, %v841
      %v843 = vpop.f32.mrb[0].mxu0
      %v844 = vpop.f32.mrb[0].mxu0
      %v845 = vadd.f32 %v709, %v844
      %v846 = vpop.f32.mrb[0].mxu0
      %847 = vmatprep.mubr.bf16.mxu0 0
      %848 = vmatmul.mubr.bf16.gmra.mrb[0].mxu0 %v687
      %v849 = vpop.f32.mrb[0].mxu0
      %v850 = vadd.f32 %v709, %v849
      %v851 = vpop.f32.mrb[0].mxu0
      %v852 = vpop.f32.mrb[0].mxu0
      %v853 = vadd.f32 %v709, %v852
      %v854 = vpop.f32.mrb[0].mxu0
      %855 = vdwg.mxu0
      %v856 = vmax.f32 %v794, 0.0
      %v857 = vmax.f32 %v797, 0.0
      %v858 = vmax.f32 %v802, 0.0
      %v859 = vmax.f32 %v805, 0.0
      %v860 = vmax.f32 %v810, 0.0
      %v861 = vmax.f32 %v813, 0.0
      %v862 = vmax.f32 %v818, 0.0
      %v863 = vmax.f32 %v821, 0.0
      %v864 = vmax.f32 %v826, 0.0
      %v865 = vmax.f32 %v829, 0.0
      %v866 = vmax.f32 %v834, 0.0
      %v867 = vmax.f32 %v837, 0.0
      %v868 = vmax.f32 %v842, 0.0
      %v869 = vmax.f32 %v845, 0.0
      %v870 = vmax.f32 %v850, 0.0
      %v871 = vmax.f32 %v853, 0.0
      %s872 = scalar_lea.vmem [#allocation2], 48
      %873 = vst [vmem:[%s872 + $0x8] sm:$0xff] %v856
      %874 = vst [vmem:[%s872 + $0x28] sm:$0xff] %v857
      %875 = vst [vmem:[%s872 + $0x48] sm:$0xff] %v858
      %876 = vst [vmem:[%s872 + $0x68] sm:$0xff] %v859
      %877 = vst [vmem:[%s872 + $0x88] sm:$0xff] %v860
      %878 = vst [vmem:[%s872 + $0xa8] sm:$0xff] %v861
      %879 = vst [vmem:[%s872 + $0xc8] sm:$0xff] %v862
      %880 = vst [vmem:[%s872 + $0xe8] sm:$0xff] %v863
      %881 = vst [vmem:[%s872 + $0x108] sm:$0xff] %v864
      %882 = vst [vmem:[%s872 + $0x128] sm:$0xff] %v865
      %883 = vst [vmem:[%s872 + $0x148] sm:$0xff] %v866
      %884 = vst [vmem:[%s872 + $0x168] sm:$0xff] %v867
      %885 = vst [vmem:[%s872 + $0x188] sm:$0xff] %v868
      %886 = vst [vmem:[%s872 + $0x1a8] sm:$0xff] %v869
      %887 = vst [vmem:[%s872 + $0x1c8] sm:$0xff] %v870
      %888 = vst [vmem:[%s872 + $0x1e8] sm:$0xff] %v871
      %s889 = scalar_lea.vmem [#allocation2], 16
      %v890 = vld [vmem:[%s889 + $0x7] sm:$0xff]
      %v891 = vld [vmem:[%s889 + $0x27] sm:$0xff]
      %v892 = vld [vmem:[%s889 + $0x47] sm:$0xff]
      %v893 = vld [vmem:[%s889 + $0x67] sm:$0xff]
      %v894 = vld [vmem:[%s889 + $0x87] sm:$0xff]
      %v895 = vld [vmem:[%s889 + $0xa7] sm:$0xff]
      %v896 = vld [vmem:[%s889 + $0xc7] sm:$0xff]
      %v897 = vld [vmem:[%s889 + $0xe7] sm:$0xff]
      %v898 = vld [vmem:[%s889 + $0x107] sm:$0xff]
      %v899 = vld [vmem:[%s889 + $0x127] sm:$0xff]
      %v900 = vld [vmem:[%s889 + $0x147] sm:$0xff]
      %v901 = vld [vmem:[%s889 + $0x167] sm:$0xff]
      %v902 = vld [vmem:[%s889 + $0x187] sm:$0xff]
      %v903 = vld [vmem:[%s889 + $0x1a7] sm:$0xff]
      %v904 = vld [vmem:[%s889 + $0x1c7] sm:$0xff]
      %v905 = vld [vmem:[%s889 + $0x1e7] sm:$0xff]
      %v906 = vld [vmem:[%s889 + $0x207] sm:$0xff]
      %v907 = vpack.c.bf16 %v892, %v890
      %v908 = vpack.c.bf16 %v896, %v894
      %v909 = vpack.c.bf16 %v900, %v898
      %v910 = vpack.c.bf16 %v904, %v902
      %v911 = vld [vmem:[%s3] sm:$0xf]
      %v912 = vld [vmem:[%s3 + $0x4] sm:$0xf]
      %v913 = vld [vmem:[%s3 + $0x8] sm:$0xf]
      %v914 = vld [vmem:[%s3 + $0xc] sm:$0xf]
      %v915 = vld [vmem:[%s3 + $0x10] sm:$0xf]
      %v916 = vld [vmem:[%s3 + $0x14] sm:$0xf]
      %v917 = vld [vmem:[%s3 + $0x18] sm:$0xf]
      %v918 = vld [vmem:[%s3 + $0x1c] sm:$0xf]
      %v919 = vld [vmem:[%s3 + $0x20] sm:$0xf]
      %v920 = vld [vmem:[%s3 + $0x24] sm:$0xf]
      %v921 = vld [vmem:[%s3 + $0x28] sm:$0xf]
      %v922 = vld [vmem:[%s3 + $0x2c] sm:$0xf]
      %v923 = vld [vmem:[%s3 + $0x30] sm:$0xf]
      %v924 = vld [vmem:[%s3 + $0x34] sm:$0xf]
      %v925 = vld [vmem:[%s3 + $0x38] sm:$0xf]
      %v926 = vld [vmem:[%s3 + $0x3c] sm:$0xf]
      %v927 = vpack.c.bf16 %v893, %v891
      %v928 = vpack.c.bf16 %v897, %v895
      %v929 = vpack.c.bf16 %v901, %v899
      %v930 = vpack.c.bf16 %v905, %v903
      %s931 = scalar_lea.vmem %s3, 192
      %v932 = vld [vmem:[%s931] sm:$0xf]
      %v933 = vld [vmem:[%s931 + $0x4] sm:$0xf]
      %v934 = vld [vmem:[%s931 + $0x8] sm:$0xf]
      %v935 = vld [vmem:[%s931 + $0xc] sm:$0xf]
      %v936 = vld [vmem:[%s931 + $0x10] sm:$0xf]
      %v937 = vld [vmem:[%s931 + $0x14] sm:$0xf]
      %v938 = vld [vmem:[%s931 + $0x18] sm:$0xf]
      %v939 = vld [vmem:[%s931 + $0x1c] sm:$0xf]
      %v940 = vld [vmem:[%s931 + $0x20] sm:$0xf]
      %v941 = vld [vmem:[%s931 + $0x24] sm:$0xf]
      %v942 = vld [vmem:[%s931 + $0x28] sm:$0xf]
      %v943 = vld [vmem:[%s931 + $0x2c] sm:$0xf]
      %v944 = vld [vmem:[%s931 + $0x30] sm:$0xf]
      %v945 = vld [vmem:[%s931 + $0x34] sm:$0xf]
      %v946 = vld [vmem:[%s931 + $0x38] sm:$0xf]
      %v947 = vld [vmem:[%s931 + $0x3c] sm:$0xf]
      %v964 = vunpack.c.l.b16 %v932
      %v965 = vunpack.c.l.b16 %v933
      %v966 = vunpack.c.l.b16 %v934
      %v967 = vunpack.c.l.b16 %v935
      %v968 = vunpack.c.l.b16 %v936
      %v969 = vunpack.c.l.b16 %v937
      %v970 = vunpack.c.l.b16 %v938
      %v971 = vunpack.c.l.b16 %v939
      %v972 = vunpack.c.l.b16 %v940
      %v973 = vunpack.c.l.b16 %v941
      %v974 = vunpack.c.l.b16 %v942
      %v975 = vunpack.c.l.b16 %v943
      %v976 = vunpack.c.l.b16 %v944
      %v977 = vunpack.c.l.b16 %v945
      %v978 = vunpack.c.l.b16 %v946
      %v979 = vunpack.c.l.b16 %v947
      %v980 = vpack.c.b16 %v965, %v964
      %v981 = vpack.c.b16 %v967, %v966
      %v982 = vpack.c.b16 %v969, %v968
      %v983 = vpack.c.b16 %v971, %v970
      %v984 = vpack.c.b16 %v973, %v972
      %v985 = vpack.c.b16 %v975, %v974
      %v986 = vpack.c.b16 %v977, %v976
      %v987 = vpack.c.b16 %v979, %v978
      %996 = vmatprep.subr.bf16.mxu0 0
      %997 = vmatpush1.bf16.msra.mxu0 %v980
      %998 = vmatprep.subr.bf16.mxu0 0
      %999 = vmatpush1.bf16.msra.mxu0 %v981
      %1000 = vmatprep.subr.bf16.mxu0 0
      %1001 = vmatpush1.bf16.msra.mxu0 %v982
      %1002 = vmatprep.subr.bf16.mxu0 0
      %1003 = vmatpush1.bf16.msra.mxu0 %v983
      %1004 = vmatprep.subr.bf16.mxu0 0
      %1005 = vmatpush1.bf16.msra.mxu0 %v984
      %1006 = vmatprep.subr.bf16.mxu0 0
      %1007 = vmatpush1.bf16.msra.mxu0 %v985
      %1008 = vmatprep.subr.bf16.mxu0 0
      %1009 = vmatpush1.bf16.msra.mxu0 %v986
      %1010 = vmatprep.subr.bf16.mxu0 0
      %1011 = vmatpush1.bf16.msra.mxu0 %v987
      %1012 = vmatprep.subr.bf16.mxu0 0
      %1013 = vmatpush1.bf16.msra.mxu0 0
      %1014 = vmatprep.subr.bf16.mxu0 0
      %1015 = vmatpush1.bf16.msra.mxu0 0
      %1016 = vmatprep.subr.bf16.mxu0 0
      %1017 = vmatpush1.bf16.msra.mxu0 0
      %1018 = vmatprep.subr.bf16.mxu0 0
      %1019 = vmatpush1.bf16.msra.mxu0 0
      %1020 = vmatprep.subr.bf16.mxu0 0
      %1021 = vmatpush1.bf16.msra.mxu0 0
      %1022 = vmatprep.subr.bf16.mxu0 0
      %1023 = vmatpush1.bf16.msra.mxu0 0
      %1024 = vmatprep.subr.bf16.mxu0 0
      %1025 = vmatpush1.bf16.msra.mxu0 0
      %1026 = vmatprep.subr.bf16.mxu0 0
      %1027 = vmatpush1.bf16.msra.mxu0 0
      %1028 = vmatprep.mubr.bf16.mxu0 0
      %1029 = vmatmul.mubr.bf16.gmra.mrb[0].mxu0 %v927
      %v1030 = vpop.f32.mrb[0].mxu0
      %v1031 = vadd.f32 0.0, %v1030
      %v1032 = vpop.f32.mrb[0].mxu0
      %v1033 = vpop.f32.mrb[0].mxu0
      %v1034 = vadd.f32 0.0, %v1033
      %v1035 = vpop.f32.mrb[0].mxu0
      %1036 = vmatprep.mubr.bf16.mxu0 0
      %1037 = vmatmul.mubr.bf16.gmra.mrb[0].mxu0 %v928
      %v1038 = vpop.f32.mrb[0].mxu0
      %v1039 = vadd.f32 0.0, %v1038
      %v1040 = vpop.f32.mrb[0].mxu0
      %v1041 = vpop.f32.mrb[0].mxu0
      %v1042 = vadd.f32 0.0, %v1041
      %v1043 = vpop.f32.mrb[0].mxu0
      %1044 = vmatprep.mubr.bf16.mxu0 0
      %1045 = vmatmul.mubr.bf16.gmra.mrb[0].mxu0 %v929
      %v1046 = vpop.f32.mrb[0].mxu0
      %v1047 = vadd.f32 0.0, %v1046
      %v1048 = vpop.f32.mrb[0].mxu0
      %v1049 = vpop.f32.mrb[0].mxu0
      %v1050 = vadd.f32 0.0, %v1049
      %v1051 = vpop.f32.mrb[0].mxu0
      %1052 = vmatprep.mubr.bf16.mxu0 0
      %1053 = vmatmul.mubr.bf16.gmra.mrb[0].mxu0 %v930
      %v1054 = vpop.f32.mrb[0].mxu0
      %v1055 = vadd.f32 0.0, %v1054
      %v1056 = vpop.f32.mrb[0].mxu0
      %v1057 = vpop.f32.mrb[0].mxu0
      %v1058 = vadd.f32 0.0, %v1057
      %v1059 = vpop.f32.mrb[0].mxu0
      %1060 = vdwg.mxu0
      %v1077 = vunpack.c.l.b16 %v911
      %v1078 = vunpack.c.l.b16 %v912
      %v1079 = vunpack.c.l.b16 %v913
      %v1080 = vunpack.c.l.b16 %v914
      %v1081 = vunpack.c.l.b16 %v915
      %v1082 = vunpack.c.l.b16 %v916
      %v1083 = vunpack.c.l.b16 %v917
      %v1084 = vunpack.c.l.b16 %v918
      %v1085 = vunpack.c.l.b16 %v919
      %v1086 = vunpack.c.l.b16 %v920
      %v1087 = vunpack.c.l.b16 %v921
      %v1088 = vunpack.c.l.b16 %v922
      %v1089 = vunpack.c.l.b16 %v923
      %v1090 = vunpack.c.l.b16 %v924
      %v1091 = vunpack.c.l.b16 %v925
      %v1092 = vunpack.c.l.b16 %v926
      %v1093 = vpack.c.b16 %v1078, %v1077
      %v1094 = vpack.c.b16 %v1080, %v1079
      %v1095 = vpack.c.b16 %v1082, %v1081
      %v1096 = vpack.c.b16 %v1084, %v1083
      %v1097 = vpack.c.b16 %v1086, %v1085
      %v1098 = vpack.c.b16 %v1088, %v1087
      %v1099 = vpack.c.b16 %v1090, %v1089
      %v1100 = vpack.c.b16 %v1092, %v1091
      %1109 = vmatprep.subr.bf16.mxu0 0
      %1110 = vmatpush1.bf16.msra.mxu0 %v1093
      %1111 = vmatprep.subr.bf16.mxu0 0
      %1112 = vmatpush1.bf16.msra.mxu0 %v1094
      %1113 = vmatprep.subr.bf16.mxu0 0
      %1114 = vmatpush1.bf16.msra.mxu0 %v1095
      %1115 = vmatprep.subr.bf16.mxu0 0
      %1116 = vmatpush1.bf16.msra.mxu0 %v1096
      %1117 = vmatprep.subr.bf16.mxu0 0
      %1118 = vmatpush1.bf16.msra.mxu0 %v1097
      %1119 = vmatprep.subr.bf16.mxu0 0
      %1120 = vmatpush1.bf16.msra.mxu0 %v1098
      %1121 = vmatprep.subr.bf16.mxu0 0
      %1122 = vmatpush1.bf16.msra.mxu0 %v1099
      %1123 = vmatprep.subr.bf16.mxu0 0
      %1124 = vmatpush1.bf16.msra.mxu0 %v1100
      %1125 = vmatprep.subr.bf16.mxu0 0
      %1126 = vmatpush1.bf16.msra.mxu0 0
      %1127 = vmatprep.subr.bf16.mxu0 0
      %1128 = vmatpush1.bf16.msra.mxu0 0
      %1129 = vmatprep.subr.bf16.mxu0 0
      %1130 = vmatpush1.bf16.msra.mxu0 0
      %1131 = vmatprep.subr.bf16.mxu0 0
      %1132 = vmatpush1.bf16.msra.mxu0 0
      %1133 = vmatprep.subr.bf16.mxu0 0
      %1134 = vmatpush1.bf16.msra.mxu0 0
      %1135 = vmatprep.subr.bf16.mxu0 0
      %1136 = vmatpush1.bf16.msra.mxu0 0
      %1137 = vmatprep.subr.bf16.mxu0 0
      %1138 = vmatpush1.bf16.msra.mxu0 0
      %1139 = vmatprep.subr.bf16.mxu0 0
      %1140 = vmatpush1.bf16.msra.mxu0 0
      %1141 = vmatprep.mubr.bf16.mxu0 0
      %1142 = vmatmul.mubr.bf16.gmra.mrb[0].mxu0 %v907
      %v1143 = vpop.f32.mrb[0].mxu0
      %v1144 = vadd.f32 %v1031, %v1143
      %v1145 = vpop.f32.mrb[0].mxu0
      %v1146 = vpop.f32.mrb[0].mxu0
      %v1147 = vadd.f32 %v1034, %v1146
      %v1148 = vpop.f32.mrb[0].mxu0
      %1149 = vmatprep.mubr.bf16.mxu0 0
      %1150 = vmatmul.mubr.bf16.gmra.mrb[0].mxu0 %v908
      %v1151 = vpop.f32.mrb[0].mxu0
      %v1152 = vadd.f32 %v1039, %v1151
      %v1153 = vpop.f32.mrb[0].mxu0
      %v1154 = vpop.f32.mrb[0].mxu0
      %v1155 = vadd.f32 %v1042, %v1154
      %v1156 = vpop.f32.mrb[0].mxu0
      %1157 = vmatprep.mubr.bf16.mxu0 0
      %1158 = vmatmul.mubr.bf16.gmra.mrb[0].mxu0 %v909
      %v1159 = vpop.f32.mrb[0].mxu0
      %v1160 = vadd.f32 %v1047, %v1159
      %v1161 = vpop.f32.mrb[0].mxu0
      %v1162 = vpop.f32.mrb[0].mxu0
      %v1163 = vadd.f32 %v1050, %v1162
      %v1164 = vpop.f32.mrb[0].mxu0
      %1165 = vmatprep.mubr.bf16.mxu0 0
      %1166 = vmatmul.mubr.bf16.gmra.mrb[0].mxu0 %v910
      %v1167 = vpop.f32.mrb[0].mxu0
      %v1168 = vadd.f32 %v1055, %v1167
      %v1169 = vpop.f32.mrb[0].mxu0
      %v1170 = vpop.f32.mrb[0].mxu0
      %v1171 = vadd.f32 %v1058, %v1170
      %v1172 = vpop.f32.mrb[0].mxu0
      %1173 = vdwg.mxu0
      %v1174 = vpack.c.bf16 %v894, %v892
      %v1175 = vpack.c.bf16 %v898, %v896
      %v1176 = vpack.c.bf16 %v902, %v900
      %v1177 = vpack.c.bf16 %v906, %v904
      %s1178 = scalar_lea.vmem %s3, 384
      %v1179 = vld [vmem:[%s1178] sm:$0xf]
      %v1180 = vld [vmem:[%s1178 + $0x4] sm:$0xf]
      %v1181 = vld [vmem:[%s1178 + $0x8] sm:$0xf]
      %v1182 = vld [vmem:[%s1178 + $0xc] sm:$0xf]
      %v1183 = vld [vmem:[%s1178 + $0x10] sm:$0xf]
      %v1184 = vld [vmem:[%s1178 + $0x14] sm:$0xf]
      %v1185 = vld [vmem:[%s1178 + $0x18] sm:$0xf]
      %v1186 = vld [vmem:[%s1178 + $0x1c] sm:$0xf]
      %v1187 = vld [vmem:[%s1178 + $0x20] sm:$0xf]
      %v1188 = vld [vmem:[%s1178 + $0x24] sm:$0xf]
      %v1189 = vld [vmem:[%s1178 + $0x28] sm:$0xf]
      %v1190 = vld [vmem:[%s1178 + $0x2c] sm:$0xf]
      %v1191 = vld [vmem:[%s1178 + $0x30] sm:$0xf]
      %v1192 = vld [vmem:[%s1178 + $0x34] sm:$0xf]
      %v1193 = vld [vmem:[%s1178 + $0x38] sm:$0xf]
      %v1194 = vld [vmem:[%s1178 + $0x3c] sm:$0xf]
      %v1211 = vunpack.c.l.b16 %v1179
      %v1212 = vunpack.c.l.b16 %v1180
      %v1213 = vunpack.c.l.b16 %v1181
      %v1214 = vunpack.c.l.b16 %v1182
      %v1215 = vunpack.c.l.b16 %v1183
      %v1216 = vunpack.c.l.b16 %v1184
      %v1217 = vunpack.c.l.b16 %v1185
      %v1218 = vunpack.c.l.b16 %v1186
      %v1219 = vunpack.c.l.b16 %v1187
      %v1220 = vunpack.c.l.b16 %v1188
      %v1221 = vunpack.c.l.b16 %v1189
      %v1222 = vunpack.c.l.b16 %v1190
      %v1223 = vunpack.c.l.b16 %v1191
      %v1224 = vunpack.c.l.b16 %v1192
      %v1225 = vunpack.c.l.b16 %v1193
      %v1226 = vunpack.c.l.b16 %v1194
      %v1227 = vpack.c.b16 %v1212, %v1211
      %v1228 = vpack.c.b16 %v1214, %v1213
      %v1229 = vpack.c.b16 %v1216, %v1215
      %v1230 = vpack.c.b16 %v1218, %v1217
      %v1231 = vpack.c.b16 %v1220, %v1219
      %v1232 = vpack.c.b16 %v1222, %v1221
      %v1233 = vpack.c.b16 %v1224, %v1223
      %v1234 = vpack.c.b16 %v1226, %v1225
      %1243 = vmatprep.subr.bf16.mxu0 0
      %1244 = vmatpush1.bf16.msra.mxu0 %v1227
      %1245 = vmatprep.subr.bf16.mxu0 0
      %1246 = vmatpush1.bf16.msra.mxu0 %v1228
      %1247 = vmatprep.subr.bf16.mxu0 0
      %1248 = vmatpush1.bf16.msra.mxu0 %v1229
      %1249 = vmatprep.subr.bf16.mxu0 0
      %1250 = vmatpush1.bf16.msra.mxu0 %v1230
      %1251 = vmatprep.subr.bf16.mxu0 0
      %1252 = vmatpush1.bf16.msra.mxu0 %v1231
      %1253 = vmatprep.subr.bf16.mxu0 0
      %1254 = vmatpush1.bf16.msra.mxu0 %v1232
      %1255 = vmatprep.subr.bf16.mxu0 0
      %1256 = vmatpush1.bf16.msra.mxu0 %v1233
      %1257 = vmatprep.subr.bf16.mxu0 0
      %1258 = vmatpush1.bf16.msra.mxu0 %v1234
      %1259 = vmatprep.subr.bf16.mxu0 0
      %1260 = vmatpush1.bf16.msra.mxu0 0
      %1261 = vmatprep.subr.bf16.mxu0 0
      %1262 = vmatpush1.bf16.msra.mxu0 0
      %1263 = vmatprep.subr.bf16.mxu0 0
      %1264 = vmatpush1.bf16.msra.mxu0 0
      %1265 = vmatprep.subr.bf16.mxu0 0
      %1266 = vmatpush1.bf16.msra.mxu0 0
      %1267 = vmatprep.subr.bf16.mxu0 0
      %1268 = vmatpush1.bf16.msra.mxu0 0
      %1269 = vmatprep.subr.bf16.mxu0 0
      %1270 = vmatpush1.bf16.msra.mxu0 0
      %1271 = vmatprep.subr.bf16.mxu0 0
      %1272 = vmatpush1.bf16.msra.mxu0 0
      %1273 = vmatprep.subr.bf16.mxu0 0
      %1274 = vmatpush1.bf16.msra.mxu0 0
      %1275 = vmatprep.mubr.bf16.mxu0 0
      %1276 = vmatmul.mubr.bf16.gmra.mrb[0].mxu0 %v1174
      %v1277 = vpop.f32.mrb[0].mxu0
      %v1278 = vadd.f32 0.0, %v1277
      %v1279 = vpop.f32.mrb[0].mxu0
      %v1280 = vpop.f32.mrb[0].mxu0
      %v1281 = vadd.f32 0.0, %v1280
      %v1282 = vpop.f32.mrb[0].mxu0
      %1283 = vmatprep.mubr.bf16.mxu0 0
      %1284 = vmatmul.mubr.bf16.gmra.mrb[0].mxu0 %v1175
      %v1285 = vpop.f32.mrb[0].mxu0
      %v1286 = vadd.f32 0.0, %v1285
      %v1287 = vpop.f32.mrb[0].mxu0
      %v1288 = vpop.f32.mrb[0].mxu0
      %v1289 = vadd.f32 0.0, %v1288
      %v1290 = vpop.f32.mrb[0].mxu0
      %1291 = vmatprep.mubr.bf16.mxu0 0
      %1292 = vmatmul.mubr.bf16.gmra.mrb[0].mxu0 %v1176
      %v1293 = vpop.f32.mrb[0].mxu0
      %v1294 = vadd.f32 0.0, %v1293
      %v1295 = vpop.f32.mrb[0].mxu0
      %v1296 = vpop.f32.mrb[0].mxu0
      %v1297 = vadd.f32 0.0, %v1296
      %v1298 = vpop.f32.mrb[0].mxu0
      %1299 = vmatprep.mubr.bf16.mxu0 0
      %1300 = vmatmul.mubr.bf16.gmra.mrb[0].mxu0 %v1177
      %v1301 = vpop.f32.mrb[0].mxu0
      %v1302 = vadd.f32 0.0, %v1301
      %v1303 = vpop.f32.mrb[0].mxu0
      %v1304 = vpop.f32.mrb[0].mxu0
      %v1305 = vadd.f32 0.0, %v1304
      %v1306 = vpop.f32.mrb[0].mxu0
      %1307 = vdwg.mxu0
      %v1308 = vadd.f32 %v1144, %v1278
      %v1309 = vadd.f32 %v1147, %v1281
      %v1310 = vadd.f32 %v1152, %v1286
      %v1311 = vadd.f32 %v1155, %v1289
      %v1312 = vadd.f32 %v1160, %v1294
      %v1313 = vadd.f32 %v1163, %v1297
      %v1314 = vadd.f32 %v1168, %v1302
      %v1315 = vadd.f32 %v1171, %v1305
      %v1316 = vld [vmem:[#allocation2 + $0x8] sm:$0xff]
      %v1317 = vld [vmem:[#allocation2 + $0x28] sm:$0xff]
      %v1318 = vld [vmem:[#allocation2 + $0x48] sm:$0xff]
      %v1319 = vld [vmem:[#allocation2 + $0x68] sm:$0xff]
      %v1320 = vld [vmem:[#allocation2 + $0x88] sm:$0xff]
      %v1321 = vld [vmem:[#allocation2 + $0xa8] sm:$0xff]
      %v1322 = vld [vmem:[#allocation2 + $0xc8] sm:$0xff]
      %v1323 = vld [vmem:[#allocation2 + $0xe8] sm:$0xff]
      %v1324 = vld [vmem:[#allocation2 + $0x108] sm:$0xff]
      %v1325 = vld [vmem:[#allocation2 + $0x128] sm:$0xff]
      %v1326 = vld [vmem:[#allocation2 + $0x148] sm:$0xff]
      %v1327 = vld [vmem:[#allocation2 + $0x168] sm:$0xff]
      %v1328 = vld [vmem:[#allocation2 + $0x188] sm:$0xff]
      %v1329 = vld [vmem:[#allocation2 + $0x1a8] sm:$0xff]
      %v1330 = vld [vmem:[#allocation2 + $0x1c8] sm:$0xff]
      %v1331 = vld [vmem:[#allocation2 + $0x1e8] sm:$0xff]
      %v1332 = vld [vmem:[#allocation2 + $0x208] sm:$0xff]
      %v1333 = vpack.c.bf16 %v1318, %v1316
      %v1334 = vpack.c.bf16 %v1322, %v1320
      %v1335 = vpack.c.bf16 %v1326, %v1324
      %v1336 = vpack.c.bf16 %v1330, %v1328
      %s1337 = scalar_lea.vmem %s3, 64
      %v1338 = vld [vmem:[%s1337] sm:$0xf]
      %v1339 = vld [vmem:[%s1337 + $0x4] sm:$0xf]
      %v1340 = vld [vmem:[%s1337 + $0x8] sm:$0xf]
      %v1341 = vld [vmem:[%s1337 + $0xc] sm:$0xf]
      %v1342 = vld [vmem:[%s1337 + $0x10] sm:$0xf]
      %v1343 = vld [vmem:[%s1337 + $0x14] sm:$0xf]
      %v1344 = vld [vmem:[%s1337 + $0x18] sm:$0xf]
      %v1345 = vld [vmem:[%s1337 + $0x1c] sm:$0xf]
      %v1346 = vld [vmem:[%s1337 + $0x20] sm:$0xf]
      %v1347 = vld [vmem:[%s1337 + $0x24] sm:$0xf]
      %v1348 = vld [vmem:[%s1337 + $0x28] sm:$0xf]
      %v1349 = vld [vmem:[%s1337 + $0x2c] sm:$0xf]
      %v1350 = vld [vmem:[%s1337 + $0x30] sm:$0xf]
      %v1351 = vld [vmem:[%s1337 + $0x34] sm:$0xf]
      %v1352 = vld [vmem:[%s1337 + $0x38] sm:$0xf]
      %v1353 = vld [vmem:[%s1337 + $0x3c] sm:$0xf]
      %v1370 = vunpack.c.l.b16 %v1338
      %v1371 = vunpack.c.l.b16 %v1339
      %v1372 = vunpack.c.l.b16 %v1340
      %v1373 = vunpack.c.l.b16 %v1341
      %v1374 = vunpack.c.l.b16 %v1342
      %v1375 = vunpack.c.l.b16 %v1343
      %v1376 = vunpack.c.l.b16 %v1344
      %v1377 = vunpack.c.l.b16 %v1345
      %v1378 = vunpack.c.l.b16 %v1346
      %v1379 = vunpack.c.l.b16 %v1347
      %v1380 = vunpack.c.l.b16 %v1348
      %v1381 = vunpack.c.l.b16 %v1349
      %v1382 = vunpack.c.l.b16 %v1350
      %v1383 = vunpack.c.l.b16 %v1351
      %v1384 = vunpack.c.l.b16 %v1352
      %v1385 = vunpack.c.l.b16 %v1353
      %v1386 = vpack.c.b16 %v1371, %v1370
      %v1387 = vpack.c.b16 %v1373, %v1372
      %v1388 = vpack.c.b16 %v1375, %v1374
      %v1389 = vpack.c.b16 %v1377, %v1376
      %v1390 = vpack.c.b16 %v1379, %v1378
      %v1391 = vpack.c.b16 %v1381, %v1380
      %v1392 = vpack.c.b16 %v1383, %v1382
      %v1393 = vpack.c.b16 %v1385, %v1384
      %1402 = vmatprep.subr.bf16.mxu0 0
      %1403 = vmatpush1.bf16.msra.mxu0 %v1386
      %1404 = vmatprep.subr.bf16.mxu0 0
      %1405 = vmatpush1.bf16.msra.mxu0 %v1387
      %1406 = vmatprep.subr.bf16.mxu0 0
      %1407 = vmatpush1.bf16.msra.mxu0 %v1388
      %1408 = vmatprep.subr.bf16.mxu0 0
      %1409 = vmatpush1.bf16.msra.mxu0 %v1389
      %1410 = vmatprep.subr.bf16.mxu0 0
      %1411 = vmatpush1.bf16.msra.mxu0 %v1390
      %1412 = vmatprep.subr.bf16.mxu0 0
      %1413 = vmatpush1.bf16.msra.mxu0 %v1391
      %1414 = vmatprep.subr.bf16.mxu0 0
      %1415 = vmatpush1.bf16.msra.mxu0 %v1392
      %1416 = vmatprep.subr.bf16.mxu0 0
      %1417 = vmatpush1.bf16.msra.mxu0 %v1393
      %1418 = vmatprep.subr.bf16.mxu0 0
      %1419 = vmatpush1.bf16.msra.mxu0 0
      %1420 = vmatprep.subr.bf16.mxu0 0
      %1421 = vmatpush1.bf16.msra.mxu0 0
      %1422 = vmatprep.subr.bf16.mxu0 0
      %1423 = vmatpush1.bf16.msra.mxu0 0
      %1424 = vmatprep.subr.bf16.mxu0 0
      %1425 = vmatpush1.bf16.msra.mxu0 0
      %1426 = vmatprep.subr.bf16.mxu0 0
      %1427 = vmatpush1.bf16.msra.mxu0 0
      %1428 = vmatprep.subr.bf16.mxu0 0
      %1429 = vmatpush1.bf16.msra.mxu0 0
      %1430 = vmatprep.subr.bf16.mxu0 0
      %1431 = vmatpush1.bf16.msra.mxu0 0
      %1432 = vmatprep.subr.bf16.mxu0 0
      %1433 = vmatpush1.bf16.msra.mxu0 0
      %1434 = vmatprep.mubr.bf16.mxu0 0
      %1435 = vmatmul.mubr.bf16.gmra.mrb[0].mxu0 %v1333
      %v1436 = vpop.f32.mrb[0].mxu0
      %v1437 = vadd.f32 0.0, %v1436
      %v1438 = vpop.f32.mrb[0].mxu0
      %v1439 = vpop.f32.mrb[0].mxu0
      %v1440 = vadd.f32 0.0, %v1439
      %v1441 = vpop.f32.mrb[0].mxu0
      %1442 = vmatprep.mubr.bf16.mxu0 0
      %1443 = vmatmul.mubr.bf16.gmra.mrb[0].mxu0 %v1334
      %v1444 = vpop.f32.mrb[0].mxu0
      %v1445 = vadd.f32 0.0, %v1444
      %v1446 = vpop.f32.mrb[0].mxu0
      %v1447 = vpop.f32.mrb[0].mxu0
      %v1448 = vadd.f32 0.0, %v1447
      %v1449 = vpop.f32.mrb[0].mxu0
      %1450 = vmatprep.mubr.bf16.mxu0 0
      %1451 = vmatmul.mubr.bf16.gmra.mrb[0].mxu0 %v1335
      %v1452 = vpop.f32.mrb[0].mxu0
      %v1453 = vadd.f32 0.0, %v1452
      %v1454 = vpop.f32.mrb[0].mxu0
      %v1455 = vpop.f32.mrb[0].mxu0
      %v1456 = vadd.f32 0.0, %v1455
      %v1457 = vpop.f32.mrb[0].mxu0
      %1458 = vmatprep.mubr.bf16.mxu0 0
      %1459 = vmatmul.mubr.bf16.gmra.mrb[0].mxu0 %v1336
      %v1460 = vpop.f32.mrb[0].mxu0
      %v1461 = vadd.f32 0.0, %v1460
      %v1462 = vpop.f32.mrb[0].mxu0
      %v1463 = vpop.f32.mrb[0].mxu0
      %v1464 = vadd.f32 0.0, %v1463
      %v1465 = vpop.f32.mrb[0].mxu0
      %1466 = vdwg.mxu0
      %v1467 = vadd.f32 %v1308, %v1437
      %v1468 = vadd.f32 %v1309, %v1440
      %v1469 = vadd.f32 %v1310, %v1445
      %v1470 = vadd.f32 %v1311, %v1448
      %v1471 = vadd.f32 %v1312, %v1453
      %v1472 = vadd.f32 %v1313, %v1456
      %v1473 = vadd.f32 %v1314, %v1461
      %v1474 = vadd.f32 %v1315, %v1464
      %v1475 = vpack.c.bf16 %v1319, %v1317
      %v1476 = vpack.c.bf16 %v1323, %v1321
      %v1477 = vpack.c.bf16 %v1327, %v1325
      %v1478 = vpack.c.bf16 %v1331, %v1329
      %s1479 = scalar_lea.vmem %s3, 256
      %v1480 = vld [vmem:[%s1479] sm:$0xf]
      %v1481 = vld [vmem:[%s1479 + $0x4] sm:$0xf]
      %v1482 = vld [vmem:[%s1479 + $0x8] sm:$0xf]
      %v1483 = vld [vmem:[%s1479 + $0xc] sm:$0xf]
      %v1484 = vld [vmem:[%s1479 + $0x10] sm:$0xf]
      %v1485 = vld [vmem:[%s1479 + $0x14] sm:$0xf]
      %v1486 = vld [vmem:[%s1479 + $0x18] sm:$0xf]
      %v1487 = vld [vmem:[%s1479 + $0x1c] sm:$0xf]
      %v1488 = vld [vmem:[%s1479 + $0x20] sm:$0xf]
      %v1489 = vld [vmem:[%s1479 + $0x24] sm:$0xf]
      %v1490 = vld [vmem:[%s1479 + $0x28] sm:$0xf]
      %v1491 = vld [vmem:[%s1479 + $0x2c] sm:$0xf]
      %v1492 = vld [vmem:[%s1479 + $0x30] sm:$0xf]
      %v1493 = vld [vmem:[%s1479 + $0x34] sm:$0xf]
      %v1494 = vld [vmem:[%s1479 + $0x38] sm:$0xf]
      %v1495 = vld [vmem:[%s1479 + $0x3c] sm:$0xf]
      %v1512 = vunpack.c.l.b16 %v1480
      %v1513 = vunpack.c.l.b16 %v1481
      %v1514 = vunpack.c.l.b16 %v1482
      %v1515 = vunpack.c.l.b16 %v1483
      %v1516 = vunpack.c.l.b16 %v1484
      %v1517 = vunpack.c.l.b16 %v1485
      %v1518 = vunpack.c.l.b16 %v1486
      %v1519 = vunpack.c.l.b16 %v1487
      %v1520 = vunpack.c.l.b16 %v1488
      %v1521 = vunpack.c.l.b16 %v1489
      %v1522 = vunpack.c.l.b16 %v1490
      %v1523 = vunpack.c.l.b16 %v1491
      %v1524 = vunpack.c.l.b16 %v1492
      %v1525 = vunpack.c.l.b16 %v1493
      %v1526 = vunpack.c.l.b16 %v1494
      %v1527 = vunpack.c.l.b16 %v1495
      %v1528 = vpack.c.b16 %v1513, %v1512
      %v1529 = vpack.c.b16 %v1515, %v1514
      %v1530 = vpack.c.b16 %v1517, %v1516
      %v1531 = vpack.c.b16 %v1519, %v1518
      %v1532 = vpack.c.b16 %v1521, %v1520
      %v1533 = vpack.c.b16 %v1523, %v1522
      %v1534 = vpack.c.b16 %v1525, %v1524
      %v1535 = vpack.c.b16 %v1527, %v1526
      %1544 = vmatprep.subr.bf16.mxu0 0
      %1545 = vmatpush1.bf16.msra.mxu0 %v1528
      %1546 = vmatprep.subr.bf16.mxu0 0
      %1547 = vmatpush1.bf16.msra.mxu0 %v1529
      %1548 = vmatprep.subr.bf16.mxu0 0
      %1549 = vmatpush1.bf16.msra.mxu0 %v1530
      %1550 = vmatprep.subr.bf16.mxu0 0
      %1551 = vmatpush1.bf16.msra.mxu0 %v1531
      %1552 = vmatprep.subr.bf16.mxu0 0
      %1553 = vmatpush1.bf16.msra.mxu0 %v1532
      %1554 = vmatprep.subr.bf16.mxu0 0
      %1555 = vmatpush1.bf16.msra.mxu0 %v1533
      %1556 = vmatprep.subr.bf16.mxu0 0
      %1557 = vmatpush1.bf16.msra.mxu0 %v1534
      %1558 = vmatprep.subr.bf16.mxu0 0
      %1559 = vmatpush1.bf16.msra.mxu0 %v1535
      %1560 = vmatprep.subr.bf16.mxu0 0
      %1561 = vmatpush1.bf16.msra.mxu0 0
      %1562 = vmatprep.subr.bf16.mxu0 0
      %1563 = vmatpush1.bf16.msra.mxu0 0
      %1564 = vmatprep.subr.bf16.mxu0 0
      %1565 = vmatpush1.bf16.msra.mxu0 0
      %1566 = vmatprep.subr.bf16.mxu0 0
      %1567 = vmatpush1.bf16.msra.mxu0 0
      %1568 = vmatprep.subr.bf16.mxu0 0
      %1569 = vmatpush1.bf16.msra.mxu0 0
      %1570 = vmatprep.subr.bf16.mxu0 0
      %1571 = vmatpush1.bf16.msra.mxu0 0
      %1572 = vmatprep.subr.bf16.mxu0 0
      %1573 = vmatpush1.bf16.msra.mxu0 0
      %1574 = vmatprep.subr.bf16.mxu0 0
      %1575 = vmatpush1.bf16.msra.mxu0 0
      %1576 = vmatprep.mubr.bf16.mxu0 0
      %1577 = vmatmul.mubr.bf16.gmra.mrb[0].mxu0 %v1475
      %v1578 = vpop.f32.mrb[0].mxu0
      %v1579 = vadd.f32 0.0, %v1578
      %v1580 = vpop.f32.mrb[0].mxu0
      %v1581 = vpop.f32.mrb[0].mxu0
      %v1582 = vadd.f32 0.0, %v1581
      %v1583 = vpop.f32.mrb[0].mxu0
      %1584 = vmatprep.mubr.bf16.mxu0 0
      %1585 = vmatmul.mubr.bf16.gmra.mrb[0].mxu0 %v1476
      %v1586 = vpop.f32.mrb[0].mxu0
      %v1587 = vadd.f32 0.0, %v1586
      %v1588 = vpop.f32.mrb[0].mxu0
      %v1589 = vpop.f32.mrb[0].mxu0
      %v1590 = vadd.f32 0.0, %v1589
      %v1591 = vpop.f32.mrb[0].mxu0
      %1592 = vmatprep.mubr.bf16.mxu0 0
      %1593 = vmatmul.mubr.bf16.gmra.mrb[0].mxu0 %v1477
      %v1594 = vpop.f32.mrb[0].mxu0
      %v1595 = vadd.f32 0.0, %v1594
      %v1596 = vpop.f32.mrb[0].mxu0
      %v1597 = vpop.f32.mrb[0].mxu0
      %v1598 = vadd.f32 0.0, %v1597
      %v1599 = vpop.f32.mrb[0].mxu0
      %1600 = vmatprep.mubr.bf16.mxu0 0
      %1601 = vmatmul.mubr.bf16.gmra.mrb[0].mxu0 %v1478
      %v1602 = vpop.f32.mrb[0].mxu0
      %v1603 = vadd.f32 0.0, %v1602
      %v1604 = vpop.f32.mrb[0].mxu0
      %v1605 = vpop.f32.mrb[0].mxu0
      %v1606 = vadd.f32 0.0, %v1605
      %v1607 = vpop.f32.mrb[0].mxu0
      %1608 = vdwg.mxu0
      %v1609 = vadd.f32 %v1467, %v1579
      %v1610 = vadd.f32 %v1468, %v1582
      %v1611 = vadd.f32 %v1469, %v1587
      %v1612 = vadd.f32 %v1470, %v1590
      %v1613 = vadd.f32 %v1471, %v1595
      %v1614 = vadd.f32 %v1472, %v1598
      %v1615 = vadd.f32 %v1473, %v1603
      %v1616 = vadd.f32 %v1474, %v1606
      %v1617 = vpack.c.bf16 %v1320, %v1318
      %v1618 = vpack.c.bf16 %v1324, %v1322
      %v1619 = vpack.c.bf16 %v1328, %v1326
      %v1620 = vpack.c.bf16 %v1332, %v1330
      %s1621 = scalar_lea.vmem %s3, 448
      %v1622 = vld [vmem:[%s1621] sm:$0xf]
      %v1623 = vld [vmem:[%s1621 + $0x4] sm:$0xf]
      %v1624 = vld [vmem:[%s1621 + $0x8] sm:$0xf]
      %v1625 = vld [vmem:[%s1621 + $0xc] sm:$0xf]
      %v1626 = vld [vmem:[%s1621 + $0x10] sm:$0xf]
      %v1627 = vld [vmem:[%s1621 + $0x14] sm:$0xf]
      %v1628 = vld [vmem:[%s1621 + $0x18] sm:$0xf]
      %v1629 = vld [vmem:[%s1621 + $0x1c] sm:$0xf]
      %v1630 = vld [vmem:[%s1621 + $0x20] sm:$0xf]
      %v1631 = vld [vmem:[%s1621 + $0x24] sm:$0xf]
      %v1632 = vld [vmem:[%s1621 + $0x28] sm:$0xf]
      %v1633 = vld [vmem:[%s1621 + $0x2c] sm:$0xf]
      %v1634 = vld [vmem:[%s1621 + $0x30] sm:$0xf]
      %v1635 = vld [vmem:[%s1621 + $0x34] sm:$0xf]
      %v1636 = vld [vmem:[%s1621 + $0x38] sm:$0xf]
      %v1637 = vld [vmem:[%s1621 + $0x3c] sm:$0xf]
      %v1654 = vunpack.c.l.b16 %v1622
      %v1655 = vunpack.c.l.b16 %v1623
      %v1656 = vunpack.c.l.b16 %v1624
      %v1657 = vunpack.c.l.b16 %v1625
      %v1658 = vunpack.c.l.b16 %v1626
      %v1659 = vunpack.c.l.b16 %v1627
      %v1660 = vunpack.c.l.b16 %v1628
      %v1661 = vunpack.c.l.b16 %v1629
      %v1662 = vunpack.c.l.b16 %v1630
      %v1663 = vunpack.c.l.b16 %v1631
      %v1664 = vunpack.c.l.b16 %v1632
      %v1665 = vunpack.c.l.b16 %v1633
      %v1666 = vunpack.c.l.b16 %v1634
      %v1667 = vunpack.c.l.b16 %v1635
      %v1668 = vunpack.c.l.b16 %v1636
      %v1669 = vunpack.c.l.b16 %v1637
      %v1670 = vpack.c.b16 %v1655, %v1654
      %v1671 = vpack.c.b16 %v1657, %v1656
      %v1672 = vpack.c.b16 %v1659, %v1658
      %v1673 = vpack.c.b16 %v1661, %v1660
      %v1674 = vpack.c.b16 %v1663, %v1662
      %v1675 = vpack.c.b16 %v1665, %v1664
      %v1676 = vpack.c.b16 %v1667, %v1666
      %v1677 = vpack.c.b16 %v1669, %v1668
      %1686 = vmatprep.subr.bf16.mxu0 0
      %1687 = vmatpush1.bf16.msra.mxu0 %v1670
      %1688 = vmatprep.subr.bf16.mxu0 0
      %1689 = vmatpush1.bf16.msra.mxu0 %v1671
      %1690 = vmatprep.subr.bf16.mxu0 0
      %1691 = vmatpush1.bf16.msra.mxu0 %v1672
      %1692 = vmatprep.subr.bf16.mxu0 0
      %1693 = vmatpush1.bf16.msra.mxu0 %v1673
      %1694 = vmatprep.subr.bf16.mxu0 0
      %1695 = vmatpush1.bf16.msra.mxu0 %v1674
      %1696 = vmatprep.subr.bf16.mxu0 0
      %1697 = vmatpush1.bf16.msra.mxu0 %v1675
      %1698 = vmatprep.subr.bf16.mxu0 0
      %1699 = vmatpush1.bf16.msra.mxu0 %v1676
      %1700 = vmatprep.subr.bf16.mxu0 0
      %1701 = vmatpush1.bf16.msra.mxu0 %v1677
      %1702 = vmatprep.subr.bf16.mxu0 0
      %1703 = vmatpush1.bf16.msra.mxu0 0
      %1704 = vmatprep.subr.bf16.mxu0 0
      %1705 = vmatpush1.bf16.msra.mxu0 0
      %1706 = vmatprep.subr.bf16.mxu0 0
      %1707 = vmatpush1.bf16.msra.mxu0 0
      %1708 = vmatprep.subr.bf16.mxu0 0
      %1709 = vmatpush1.bf16.msra.mxu0 0
      %1710 = vmatprep.subr.bf16.mxu0 0
      %1711 = vmatpush1.bf16.msra.mxu0 0
      %1712 = vmatprep.subr.bf16.mxu0 0
      %1713 = vmatpush1.bf16.msra.mxu0 0
      %1714 = vmatprep.subr.bf16.mxu0 0
      %1715 = vmatpush1.bf16.msra.mxu0 0
      %1716 = vmatprep.subr.bf16.mxu0 0
      %1717 = vmatpush1.bf16.msra.mxu0 0
      %1718 = vmatprep.mubr.bf16.mxu0 0
      %1719 = vmatmul.mubr.bf16.gmra.mrb[0].mxu0 %v1617
      %v1720 = vpop.f32.mrb[0].mxu0
      %v1721 = vadd.f32 0.0, %v1720
      %v1722 = vpop.f32.mrb[0].mxu0
      %v1723 = vpop.f32.mrb[0].mxu0
      %v1724 = vadd.f32 0.0, %v1723
      %v1725 = vpop.f32.mrb[0].mxu0
      %1726 = vmatprep.mubr.bf16.mxu0 0
      %1727 = vmatmul.mubr.bf16.gmra.mrb[0].mxu0 %v1618
      %v1728 = vpop.f32.mrb[0].mxu0
      %v1729 = vadd.f32 0.0, %v1728
      %v1730 = vpop.f32.mrb[0].mxu0
      %v1731 = vpop.f32.mrb[0].mxu0
      %v1732 = vadd.f32 0.0, %v1731
      %v1733 = vpop.f32.mrb[0].mxu0
      %1734 = vmatprep.mubr.bf16.mxu0 0
      %1735 = vmatmul.mubr.bf16.gmra.mrb[0].mxu0 %v1619
      %v1736 = vpop.f32.mrb[0].mxu0
      %v1737 = vadd.f32 0.0, %v1736
      %v1738 = vpop.f32.mrb[0].mxu0
      %v1739 = vpop.f32.mrb[0].mxu0
      %v1740 = vadd.f32 0.0, %v1739
      %v1741 = vpop.f32.mrb[0].mxu0
      %1742 = vmatprep.mubr.bf16.mxu0 0
      %1743 = vmatmul.mubr.bf16.gmra.mrb[0].mxu0 %v1620
      %v1744 = vpop.f32.mrb[0].mxu0
      %v1745 = vadd.f32 0.0, %v1744
      %v1746 = vpop.f32.mrb[0].mxu0
      %v1747 = vpop.f32.mrb[0].mxu0
      %v1748 = vadd.f32 0.0, %v1747
      %v1749 = vpop.f32.mrb[0].mxu0
      %1750 = vdwg.mxu0
      %v1751 = vadd.f32 %v1609, %v1721
      %v1752 = vadd.f32 %v1610, %v1724
      %v1753 = vadd.f32 %v1611, %v1729
      %v1754 = vadd.f32 %v1612, %v1732
      %v1755 = vadd.f32 %v1613, %v1737
      %v1756 = vadd.f32 %v1614, %v1740
      %v1757 = vadd.f32 %v1615, %v1745
      %v1758 = vadd.f32 %v1616, %v1748
      %v1759 = vld [vmem:[%s889 + $0x8] sm:$0xff]
      %v1760 = vld [vmem:[%s889 + $0x28] sm:$0xff]
      %v1761 = vld [vmem:[%s889 + $0x48] sm:$0xff]
      %v1762 = vld [vmem:[%s889 + $0x68] sm:$0xff]
      %v1763 = vld [vmem:[%s889 + $0x88] sm:$0xff]
      %v1764 = vld [vmem:[%s889 + $0xa8] sm:$0xff]
      %v1765 = vld [vmem:[%s889 + $0xc8] sm:$0xff]
      %v1766 = vld [vmem:[%s889 + $0xe8] sm:$0xff]
      %v1767 = vld [vmem:[%s889 + $0x108] sm:$0xff]
      %v1768 = vld [vmem:[%s889 + $0x128] sm:$0xff]
      %v1769 = vld [vmem:[%s889 + $0x148] sm:$0xff]
      %v1770 = vld [vmem:[%s889 + $0x168] sm:$0xff]
      %v1771 = vld [vmem:[%s889 + $0x188] sm:$0xff]
      %v1772 = vld [vmem:[%s889 + $0x1a8] sm:$0xff]
      %v1773 = vld [vmem:[%s889 + $0x1c8] sm:$0xff]
      %v1774 = vld [vmem:[%s889 + $0x1e8] sm:$0xff]
      %v1775 = vld [vmem:[%s889 + $0x208] sm:$0xff]
      %v1776 = vpack.c.bf16 %v1761, %v1759
      %v1777 = vpack.c.bf16 %v1765, %v1763
      %v1778 = vpack.c.bf16 %v1769, %v1767
      %v1779 = vpack.c.bf16 %v1773, %v1771
      %s1780 = scalar_lea.vmem %s3, 128
      %v1781 = vld [vmem:[%s1780] sm:$0xf]
      %v1782 = vld [vmem:[%s1780 + $0x4] sm:$0xf]
      %v1783 = vld [vmem:[%s1780 + $0x8] sm:$0xf]
      %v1784 = vld [vmem:[%s1780 + $0xc] sm:$0xf]
      %v1785 = vld [vmem:[%s1780 + $0x10] sm:$0xf]
      %v1786 = vld [vmem:[%s1780 + $0x14] sm:$0xf]
      %v1787 = vld [vmem:[%s1780 + $0x18] sm:$0xf]
      %v1788 = vld [vmem:[%s1780 + $0x1c] sm:$0xf]
      %v1789 = vld [vmem:[%s1780 + $0x20] sm:$0xf]
      %v1790 = vld [vmem:[%s1780 + $0x24] sm:$0xf]
      %v1791 = vld [vmem:[%s1780 + $0x28] sm:$0xf]
      %v1792 = vld [vmem:[%s1780 + $0x2c] sm:$0xf]
      %v1793 = vld [vmem:[%s1780 + $0x30] sm:$0xf]
      %v1794 = vld [vmem:[%s1780 + $0x34] sm:$0xf]
      %v1795 = vld [vmem:[%s1780 + $0x38] sm:$0xf]
      %v1796 = vld [vmem:[%s1780 + $0x3c] sm:$0xf]
      %v1813 = vunpack.c.l.b16 %v1781
      %v1814 = vunpack.c.l.b16 %v1782
      %v1815 = vunpack.c.l.b16 %v1783
      %v1816 = vunpack.c.l.b16 %v1784
      %v1817 = vunpack.c.l.b16 %v1785
      %v1818 = vunpack.c.l.b16 %v1786
      %v1819 = vunpack.c.l.b16 %v1787
      %v1820 = vunpack.c.l.b16 %v1788
      %v1821 = vunpack.c.l.b16 %v1789
      %v1822 = vunpack.c.l.b16 %v1790
      %v1823 = vunpack.c.l.b16 %v1791
      %v1824 = vunpack.c.l.b16 %v1792
      %v1825 = vunpack.c.l.b16 %v1793
      %v1826 = vunpack.c.l.b16 %v1794
      %v1827 = vunpack.c.l.b16 %v1795
      %v1828 = vunpack.c.l.b16 %v1796
      %v1829 = vpack.c.b16 %v1814, %v1813
      %v1830 = vpack.c.b16 %v1816, %v1815
      %v1831 = vpack.c.b16 %v1818, %v1817
      %v1832 = vpack.c.b16 %v1820, %v1819
      %v1833 = vpack.c.b16 %v1822, %v1821
      %v1834 = vpack.c.b16 %v1824, %v1823
      %v1835 = vpack.c.b16 %v1826, %v1825
      %v1836 = vpack.c.b16 %v1828, %v1827
      %1845 = vmatprep.subr.bf16.mxu0 0
      %1846 = vmatpush1.bf16.msra.mxu0 %v1829
      %1847 = vmatprep.subr.bf16.mxu0 0
      %1848 = vmatpush1.bf16.msra.mxu0 %v1830
      %1849 = vmatprep.subr.bf16.mxu0 0
      %1850 = vmatpush1.bf16.msra.mxu0 %v1831
      %1851 = vmatprep.subr.bf16.mxu0 0
      %1852 = vmatpush1.bf16.msra.mxu0 %v1832
      %1853 = vmatprep.subr.bf16.mxu0 0
      %1854 = vmatpush1.bf16.msra.mxu0 %v1833
      %1855 = vmatprep.subr.bf16.mxu0 0
      %1856 = vmatpush1.bf16.msra.mxu0 %v1834
      %1857 = vmatprep.subr.bf16.mxu0 0
      %1858 = vmatpush1.bf16.msra.mxu0 %v1835
      %1859 = vmatprep.subr.bf16.mxu0 0
      %1860 = vmatpush1.bf16.msra.mxu0 %v1836
      %1861 = vmatprep.subr.bf16.mxu0 0
      %1862 = vmatpush1.bf16.msra.mxu0 0
      %1863 = vmatprep.subr.bf16.mxu0 0
      %1864 = vmatpush1.bf16.msra.mxu0 0
      %1865 = vmatprep.subr.bf16.mxu0 0
      %1866 = vmatpush1.bf16.msra.mxu0 0
      %1867 = vmatprep.subr.bf16.mxu0 0
      %1868 = vmatpush1.bf16.msra.mxu0 0
      %1869 = vmatprep.subr.bf16.mxu0 0
      %1870 = vmatpush1.bf16.msra.mxu0 0
      %1871 = vmatprep.subr.bf16.mxu0 0
      %1872 = vmatpush1.bf16.msra.mxu0 0
      %1873 = vmatprep.subr.bf16.mxu0 0
      %1874 = vmatpush1.bf16.msra.mxu0 0
      %1875 = vmatprep.subr.bf16.mxu0 0
      %1876 = vmatpush1.bf16.msra.mxu0 0
      %1877 = vmatprep.mubr.bf16.mxu0 0
      %1878 = vmatmul.mubr.bf16.gmra.mrb[0].mxu0 %v1776
      %v1879 = vpop.f32.mrb[0].mxu0
      %v1880 = vadd.f32 0.0, %v1879
      %v1881 = vpop.f32.mrb[0].mxu0
      %v1882 = vpop.f32.mrb[0].mxu0
      %v1883 = vadd.f32 0.0, %v1882
      %v1884 = vpop.f32.mrb[0].mxu0
      %1885 = vmatprep.mubr.bf16.mxu0 0
      %1886 = vmatmul.mubr.bf16.gmra.mrb[0].mxu0 %v1777
      %v1887 = vpop.f32.mrb[0].mxu0
      %v1888 = vadd.f32 0.0, %v1887
      %v1889 = vpop.f32.mrb[0].mxu0
      %v1890 = vpop.f32.mrb[0].mxu0
      %v1891 = vadd.f32 0.0, %v1890
      %v1892 = vpop.f32.mrb[0].mxu0
      %1893 = vmatprep.mubr.bf16.mxu0 0
      %1894 = vmatmul.mubr.bf16.gmra.mrb[0].mxu0 %v1778
      %v1895 = vpop.f32.mrb[0].mxu0
      %v1896 = vadd.f32 0.0, %v1895
      %v1897 = vpop.f32.mrb[0].mxu0
      %v1898 = vpop.f32.mrb[0].mxu0
      %v1899 = vadd.f32 0.0, %v1898
      %v1900 = vpop.f32.mrb[0].mxu0
      %1901 = vmatprep.mubr.bf16.mxu0 0
      %1902 = vmatmul.mubr.bf16.gmra.mrb[0].mxu0 %v1779
      %v1903 = vpop.f32.mrb[0].mxu0
      %v1904 = vadd.f32 0.0, %v1903
      %v1905 = vpop.f32.mrb[0].mxu0
      %v1906 = vpop.f32.mrb[0].mxu0
      %v1907 = vadd.f32 0.0, %v1906
      %v1908 = vpop.f32.mrb[0].mxu0
      %1909 = vdwg.mxu0
      %v1910 = vadd.f32 %v1751, %v1880
      %v1911 = vadd.f32 %v1752, %v1883
      %v1912 = vadd.f32 %v1753, %v1888
      %v1913 = vadd.f32 %v1754, %v1891
      %v1914 = vadd.f32 %v1755, %v1896
      %v1915 = vadd.f32 %v1756, %v1899
      %v1916 = vadd.f32 %v1757, %v1904
      %v1917 = vadd.f32 %v1758, %v1907
      %v1918 = vpack.c.bf16 %v1762, %v1760
      %v1919 = vpack.c.bf16 %v1766, %v1764
      %v1920 = vpack.c.bf16 %v1770, %v1768
      %v1921 = vpack.c.bf16 %v1774, %v1772
      %s1922 = scalar_lea.vmem %s3, 320
      %v1923 = vld [vmem:[%s1922] sm:$0xf]
      %v1924 = vld [vmem:[%s1922 + $0x4] sm:$0xf]
      %v1925 = vld [vmem:[%s1922 + $0x8] sm:$0xf]
      %v1926 = vld [vmem:[%s1922 + $0xc] sm:$0xf]
      %v1927 = vld [vmem:[%s1922 + $0x10] sm:$0xf]
      %v1928 = vld [vmem:[%s1922 + $0x14] sm:$0xf]
      %v1929 = vld [vmem:[%s1922 + $0x18] sm:$0xf]
      %v1930 = vld [vmem:[%s1922 + $0x1c] sm:$0xf]
      %v1931 = vld [vmem:[%s1922 + $0x20] sm:$0xf]
      %v1932 = vld [vmem:[%s1922 + $0x24] sm:$0xf]
      %v1933 = vld [vmem:[%s1922 + $0x28] sm:$0xf]
      %v1934 = vld [vmem:[%s1922 + $0x2c] sm:$0xf]
      %v1935 = vld [vmem:[%s1922 + $0x30] sm:$0xf]
      %v1936 = vld [vmem:[%s1922 + $0x34] sm:$0xf]
      %v1937 = vld [vmem:[%s1922 + $0x38] sm:$0xf]
      %v1938 = vld [vmem:[%s1922 + $0x3c] sm:$0xf]
      %v1955 = vunpack.c.l.b16 %v1923
      %v1956 = vunpack.c.l.b16 %v1924
      %v1957 = vunpack.c.l.b16 %v1925
      %v1958 = vunpack.c.l.b16 %v1926
      %v1959 = vunpack.c.l.b16 %v1927
      %v1960 = vunpack.c.l.b16 %v1928
      %v1961 = vunpack.c.l.b16 %v1929
      %v1962 = vunpack.c.l.b16 %v1930
      %v1963 = vunpack.c.l.b16 %v1931
      %v1964 = vunpack.c.l.b16 %v1932
      %v1965 = vunpack.c.l.b16 %v1933
      %v1966 = vunpack.c.l.b16 %v1934
      %v1967 = vunpack.c.l.b16 %v1935
      %v1968 = vunpack.c.l.b16 %v1936
      %v1969 = vunpack.c.l.b16 %v1937
      %v1970 = vunpack.c.l.b16 %v1938
      %v1971 = vpack.c.b16 %v1956, %v1955
      %v1972 = vpack.c.b16 %v1958, %v1957
      %v1973 = vpack.c.b16 %v1960, %v1959
      %v1974 = vpack.c.b16 %v1962, %v1961
      %v1975 = vpack.c.b16 %v1964, %v1963
      %v1976 = vpack.c.b16 %v1966, %v1965
      %v1977 = vpack.c.b16 %v1968, %v1967
      %v1978 = vpack.c.b16 %v1970, %v1969
      %1987 = vmatprep.subr.bf16.mxu0 0
      %1988 = vmatpush1.bf16.msra.mxu0 %v1971
      %1989 = vmatprep.subr.bf16.mxu0 0
      %1990 = vmatpush1.bf16.msra.mxu0 %v1972
      %1991 = vmatprep.subr.bf16.mxu0 0
      %1992 = vmatpush1.bf16.msra.mxu0 %v1973
      %1993 = vmatprep.subr.bf16.mxu0 0
      %1994 = vmatpush1.bf16.msra.mxu0 %v1974
      %1995 = vmatprep.subr.bf16.mxu0 0
      %1996 = vmatpush1.bf16.msra.mxu0 %v1975
      %1997 = vmatprep.subr.bf16.mxu0 0
      %1998 = vmatpush1.bf16.msra.mxu0 %v1976
      %1999 = vmatprep.subr.bf16.mxu0 0
      %2000 = vmatpush1.bf16.msra.mxu0 %v1977
      %2001 = vmatprep.subr.bf16.mxu0 0
      %2002 = vmatpush1.bf16.msra.mxu0 %v1978
      %2003 = vmatprep.subr.bf16.mxu0 0
      %2004 = vmatpush1.bf16.msra.mxu0 0
      %2005 = vmatprep.subr.bf16.mxu0 0
      %2006 = vmatpush1.bf16.msra.mxu0 0
      %2007 = vmatprep.subr.bf16.mxu0 0
      %2008 = vmatpush1.bf16.msra.mxu0 0
      %2009 = vmatprep.subr.bf16.mxu0 0
      %2010 = vmatpush1.bf16.msra.mxu0 0
      %2011 = vmatprep.subr.bf16.mxu0 0
      %2012 = vmatpush1.bf16.msra.mxu0 0
      %2013 = vmatprep.subr.bf16.mxu0 0
      %2014 = vmatpush1.bf16.msra.mxu0 0
      %2015 = vmatprep.subr.bf16.mxu0 0
      %2016 = vmatpush1.bf16.msra.mxu0 0
      %2017 = vmatprep.subr.bf16.mxu0 0
      %2018 = vmatpush1.bf16.msra.mxu0 0
      %2019 = vmatprep.mubr.bf16.mxu0 0
      %2020 = vmatmul.mubr.bf16.gmra.mrb[0].mxu0 %v1918
      %v2021 = vpop.f32.mrb[0].mxu0
      %v2022 = vadd.f32 0.0, %v2021
      %v2023 = vpop.f32.mrb[0].mxu0
      %v2024 = vpop.f32.mrb[0].mxu0
      %v2025 = vadd.f32 0.0, %v2024
      %v2026 = vpop.f32.mrb[0].mxu0
      %2027 = vmatprep.mubr.bf16.mxu0 0
      %2028 = vmatmul.mubr.bf16.gmra.mrb[0].mxu0 %v1919
      %v2029 = vpop.f32.mrb[0].mxu0
      %v2030 = vadd.f32 0.0, %v2029
      %v2031 = vpop.f32.mrb[0].mxu0
      %v2032 = vpop.f32.mrb[0].mxu0
      %v2033 = vadd.f32 0.0, %v2032
      %v2034 = vpop.f32.mrb[0].mxu0
      %2035 = vmatprep.mubr.bf16.mxu0 0
      %2036 = vmatmul.mubr.bf16.gmra.mrb[0].mxu0 %v1920
      %v2037 = vpop.f32.mrb[0].mxu0
      %v2038 = vadd.f32 0.0, %v2037
      %v2039 = vpop.f32.mrb[0].mxu0
      %v2040 = vpop.f32.mrb[0].mxu0
      %v2041 = vadd.f32 0.0, %v2040
      %v2042 = vpop.f32.mrb[0].mxu0
      %2043 = vmatprep.mubr.bf16.mxu0 0
      %2044 = vmatmul.mubr.bf16.gmra.mrb[0].mxu0 %v1921
      %v2045 = vpop.f32.mrb[0].mxu0
      %v2046 = vadd.f32 0.0, %v2045
      %v2047 = vpop.f32.mrb[0].mxu0
      %v2048 = vpop.f32.mrb[0].mxu0
      %v2049 = vadd.f32 0.0, %v2048
      %v2050 = vpop.f32.mrb[0].mxu0
      %2051 = vdwg.mxu0
      %v2052 = vadd.f32 %v1910, %v2022
      %v2053 = vadd.f32 %v1911, %v2025
      %v2054 = vadd.f32 %v1912, %v2030
      %v2055 = vadd.f32 %v1913, %v2033
      %v2056 = vadd.f32 %v1914, %v2038
      %v2057 = vadd.f32 %v1915, %v2041
      %v2058 = vadd.f32 %v1916, %v2046
      %v2059 = vadd.f32 %v1917, %v2049
      %v2060 = vpack.c.bf16 %v1763, %v1761
      %v2061 = vpack.c.bf16 %v1767, %v1765
      %v2062 = vpack.c.bf16 %v1771, %v1769
      %v2063 = vpack.c.bf16 %v1775, %v1773
      %s2064 = scalar_lea.vmem %s3, 512
      %v2065 = vld [vmem:[%s2064] sm:$0xf]
      %v2066 = vld [vmem:[%s2064 + $0x4] sm:$0xf]
      %v2067 = vld [vmem:[%s2064 + $0x8] sm:$0xf]
      %v2068 = vld [vmem:[%s2064 + $0xc] sm:$0xf]
      %v2069 = vld [vmem:[%s2064 + $0x10] sm:$0xf]
      %v2070 = vld [vmem:[%s2064 + $0x14] sm:$0xf]
      %v2071 = vld [vmem:[%s2064 + $0x18] sm:$0xf]
      %v2072 = vld [vmem:[%s2064 + $0x1c] sm:$0xf]
      %v2073 = vld [vmem:[%s2064 + $0x20] sm:$0xf]
      %v2074 = vld [vmem:[%s2064 + $0x24] sm:$0xf]
      %v2075 = vld [vmem:[%s2064 + $0x28] sm:$0xf]
      %v2076 = vld [vmem:[%s2064 + $0x2c] sm:$0xf]
      %v2077 = vld [vmem:[%s2064 + $0x30] sm:$0xf]
      %v2078 = vld [vmem:[%s2064 + $0x34] sm:$0xf]
      %v2079 = vld [vmem:[%s2064 + $0x38] sm:$0xf]
      %v2080 = vld [vmem:[%s2064 + $0x3c] sm:$0xf]
      %v2097 = vunpack.c.l.b16 %v2065
      %v2098 = vunpack.c.l.b16 %v2066
      %v2099 = vunpack.c.l.b16 %v2067
      %v2100 = vunpack.c.l.b16 %v2068
      %v2101 = vunpack.c.l.b16 %v2069
      %v2102 = vunpack.c.l.b16 %v2070
      %v2103 = vunpack.c.l.b16 %v2071
      %v2104 = vunpack.c.l.b16 %v2072
      %v2105 = vunpack.c.l.b16 %v2073
      %v2106 = vunpack.c.l.b16 %v2074
      %v2107 = vunpack.c.l.b16 %v2075
      %v2108 = vunpack.c.l.b16 %v2076
      %v2109 = vunpack.c.l.b16 %v2077
      %v2110 = vunpack.c.l.b16 %v2078
      %v2111 = vunpack.c.l.b16 %v2079
      %v2112 = vunpack.c.l.b16 %v2080
      %v2113 = vpack.c.b16 %v2098, %v2097
      %v2114 = vpack.c.b16 %v2100, %v2099
      %v2115 = vpack.c.b16 %v2102, %v2101
      %v2116 = vpack.c.b16 %v2104, %v2103
      %v2117 = vpack.c.b16 %v2106, %v2105
      %v2118 = vpack.c.b16 %v2108, %v2107
      %v2119 = vpack.c.b16 %v2110, %v2109
      %v2120 = vpack.c.b16 %v2112, %v2111
      %2129 = vmatprep.subr.bf16.mxu0 0
      %2130 = vmatpush1.bf16.msra.mxu0 %v2113
      %2131 = vmatprep.subr.bf16.mxu0 0
      %2132 = vmatpush1.bf16.msra.mxu0 %v2114
      %2133 = vmatprep.subr.bf16.mxu0 0
      %2134 = vmatpush1.bf16.msra.mxu0 %v2115
      %2135 = vmatprep.subr.bf16.mxu0 0
      %2136 = vmatpush1.bf16.msra.mxu0 %v2116
      %2137 = vmatprep.subr.bf16.mxu0 0
      %2138 = vmatpush1.bf16.msra.mxu0 %v2117
      %2139 = vmatprep.subr.bf16.mxu0 0
      %2140 = vmatpush1.bf16.msra.mxu0 %v2118
      %2141 = vmatprep.subr.bf16.mxu0 0
      %2142 = vmatpush1.bf16.msra.mxu0 %v2119
      %2143 = vmatprep.subr.bf16.mxu0 0
      %2144 = vmatpush1.bf16.msra.mxu0 %v2120
      %2145 = vmatprep.subr.bf16.mxu0 0
      %2146 = vmatpush1.bf16.msra.mxu0 0
      %2147 = vmatprep.subr.bf16.mxu0 0
      %2148 = vmatpush1.bf16.msra.mxu0 0
      %2149 = vmatprep.subr.bf16.mxu0 0
      %2150 = vmatpush1.bf16.msra.mxu0 0
      %2151 = vmatprep.subr.bf16.mxu0 0
      %2152 = vmatpush1.bf16.msra.mxu0 0
      %2153 = vmatprep.subr.bf16.mxu0 0
      %2154 = vmatpush1.bf16.msra.mxu0 0
      %2155 = vmatprep.subr.bf16.mxu0 0
      %2156 = vmatpush1.bf16.msra.mxu0 0
      %2157 = vmatprep.subr.bf16.mxu0 0
      %2158 = vmatpush1.bf16.msra.mxu0 0
      %2159 = vmatprep.subr.bf16.mxu0 0
      %2160 = vmatpush1.bf16.msra.mxu0 0
      %2161 = vmatprep.mubr.bf16.mxu0 0
      %2162 = vmatmul.mubr.bf16.gmra.mrb[0].mxu0 %v2060
      %v2163 = vpop.f32.mrb[0].mxu0
      %v2164 = vadd.f32 0.0, %v2163
      %v2165 = vpop.f32.mrb[0].mxu0
      %v2166 = vpop.f32.mrb[0].mxu0
      %v2167 = vadd.f32 0.0, %v2166
      %v2168 = vpop.f32.mrb[0].mxu0
      %2169 = vmatprep.mubr.bf16.mxu0 0
      %2170 = vmatmul.mubr.bf16.gmra.mrb[0].mxu0 %v2061
      %v2171 = vpop.f32.mrb[0].mxu0
      %v2172 = vadd.f32 0.0, %v2171
      %v2173 = vpop.f32.mrb[0].mxu0
      %v2174 = vpop.f32.mrb[0].mxu0
      %v2175 = vadd.f32 0.0, %v2174
      %v2176 = vpop.f32.mrb[0].mxu0
      %2177 = vmatprep.mubr.bf16.mxu0 0
      %2178 = vmatmul.mubr.bf16.gmra.mrb[0].mxu0 %v2062
      %v2179 = vpop.f32.mrb[0].mxu0
      %v2180 = vadd.f32 0.0, %v2179
      %v2181 = vpop.f32.mrb[0].mxu0
      %v2182 = vpop.f32.mrb[0].mxu0
      %v2183 = vadd.f32 0.0, %v2182
      %v2184 = vpop.f32.mrb[0].mxu0
      %2185 = vmatprep.mubr.bf16.mxu0 0
      %2186 = vmatmul.mubr.bf16.gmra.mrb[0].mxu0 %v2063
      %v2187 = vpop.f32.mrb[0].mxu0
      %v2188 = vadd.f32 0.0, %v2187
      %v2189 = vpop.f32.mrb[0].mxu0
      %v2190 = vpop.f32.mrb[0].mxu0
      %v2191 = vadd.f32 0.0, %v2190
      %v2192 = vpop.f32.mrb[0].mxu0
      %2193 = vdwg.mxu0
      %v2194 = vadd.f32 %v2052, %v2164
      %v2195 = vadd.f32 %v2053, %v2167
      %v2196 = vadd.f32 %v2054, %v2172
      %v2197 = vadd.f32 %v2055, %v2175
      %v2198 = vadd.f32 %v2056, %v2180
      %v2199 = vadd.f32 %v2057, %v2183
      %v2200 = vadd.f32 %v2058, %v2188
      %v2201 = vadd.f32 %v2059, %v2191
      %v2202 = vld [vmem:[%s4] sm:$0x1]
      %v2204 = vlaneseq
      %v2205 = vshrl.u32 %v2204, 7
      %v2206 = vsub.s32 0, %v2205
      %v2207 = vrot.slane %v2202, %v2206
      %v2209 = vadd.f32 %v2194, %v2207
      %v2210 = vadd.f32 %v2195, %v2207
      %v2211 = vadd.f32 %v2196, %v2207
      %v2212 = vadd.f32 %v2197, %v2207
      %v2213 = vadd.f32 %v2198, %v2207
      %v2214 = vadd.f32 %v2199, %v2207
      %v2215 = vadd.f32 %v2200, %v2207
      %v2216 = vadd.f32 %v2201, %v2207
      %v2217 = vmax.f32 %v2209, 0.0
      %v2218 = vmax.f32 %v2210, 0.0
      %v2219 = vmax.f32 %v2211, 0.0
      %v2220 = vmax.f32 %v2212, 0.0
      %v2221 = vmax.f32 %v2213, 0.0
      %v2222 = vmax.f32 %v2214, 0.0
      %v2223 = vmax.f32 %v2215, 0.0
      %v2224 = vmax.f32 %v2216, 0.0
      %v2225 = vpack.c.bf16 %v2218, %v2217
      %v2226 = vpack.c.bf16 %v2220, %v2219
      %v2227 = vpack.c.bf16 %v2222, %v2221
      %v2228 = vpack.c.bf16 %v2224, %v2223
      %v2229 = vld [vmem:[%s5] sm:$0xf]
      %v2230 = vld [vmem:[%s5 + $0x4] sm:$0xf]
      %v2231 = vld [vmem:[%s5 + $0x8] sm:$0xf]
      %v2232 = vld [vmem:[%s5 + $0xc] sm:$0xf]
      %v2233 = vld [vmem:[%s5 + $0x10] sm:$0xf]
      %v2234 = vld [vmem:[%s5 + $0x14] sm:$0xf]
      %v2235 = vld [vmem:[%s5 + $0x18] sm:$0xf]
      %v2236 = vld [vmem:[%s5 + $0x1c] sm:$0xf]
      %v2237 = vld [vmem:[%s5 + $0x20] sm:$0xf]
      %v2238 = vld [vmem:[%s5 + $0x24] sm:$0xf]
      %v2239 = vld [vmem:[%s5 + $0x28] sm:$0xf]
      %v2240 = vld [vmem:[%s5 + $0x2c] sm:$0xf]
      %v2241 = vld [vmem:[%s5 + $0x30] sm:$0xf]
      %v2242 = vld [vmem:[%s5 + $0x34] sm:$0xf]
      %v2243 = vld [vmem:[%s5 + $0x38] sm:$0xf]
      %v2244 = vld [vmem:[%s5 + $0x3c] sm:$0xf]
      %v2245 = vld [vmem:[%s6] sm:$0x1]
      %v2247 = vlaneseq
      %v2248 = vshrl.u32 %v2247, 7
      %v2249 = vsub.s32 0, %v2248
      %v2250 = vrot.slane %v2245, %v2249
      %v2268 = vunpack.c.l.b16 %v2229
      %v2269 = vunpack.c.l.b16 %v2230
      %v2270 = vunpack.c.l.b16 %v2231
      %v2271 = vunpack.c.l.b16 %v2232
      %v2272 = vunpack.c.l.b16 %v2233
      %v2273 = vunpack.c.l.b16 %v2234
      %v2274 = vunpack.c.l.b16 %v2235
      %v2275 = vunpack.c.l.b16 %v2236
      %v2276 = vunpack.c.l.b16 %v2237
      %v2277 = vunpack.c.l.b16 %v2238
      %v2278 = vunpack.c.l.b16 %v2239
      %v2279 = vunpack.c.l.b16 %v2240
      %v2280 = vunpack.c.l.b16 %v2241
      %v2281 = vunpack.c.l.b16 %v2242
      %v2282 = vunpack.c.l.b16 %v2243
      %v2283 = vunpack.c.l.b16 %v2244
      %v2284 = vpack.c.b16 %v2269, %v2268
      %v2285 = vpack.c.b16 %v2271, %v2270
      %v2286 = vpack.c.b16 %v2273, %v2272
      %v2287 = vpack.c.b16 %v2275, %v2274
      %v2288 = vpack.c.b16 %v2277, %v2276
      %v2289 = vpack.c.b16 %v2279, %v2278
      %v2290 = vpack.c.b16 %v2281, %v2280
      %v2291 = vpack.c.b16 %v2283, %v2282
      %2300 = vmatprep.subr.bf16.mxu0 0
      %2301 = vmatpush1.bf16.msra.mxu0 %v2284
      %2302 = vmatprep.subr.bf16.mxu0 0
      %2303 = vmatpush1.bf16.msra.mxu0 %v2285
      %2304 = vmatprep.subr.bf16.mxu0 0
      %2305 = vmatpush1.bf16.msra.mxu0 %v2286
      %2306 = vmatprep.subr.bf16.mxu0 0
      %2307 = vmatpush1.bf16.msra.mxu0 %v2287
      %2308 = vmatprep.subr.bf16.mxu0 0
      %2309 = vmatpush1.bf16.msra.mxu0 %v2288
      %2310 = vmatprep.subr.bf16.mxu0 0
      %2311 = vmatpush1.bf16.msra.mxu0 %v2289
      %2312 = vmatprep.subr.bf16.mxu0 0
      %2313 = vmatpush1.bf16.msra.mxu0 %v2290
      %2314 = vmatprep.subr.bf16.mxu0 0
      %2315 = vmatpush1.bf16.msra.mxu0 %v2291
      %2316 = vmatprep.subr.bf16.mxu0 0
      %2317 = vmatpush1.bf16.msra.mxu0 0
      %2318 = vmatprep.subr.bf16.mxu0 0
      %2319 = vmatpush1.bf16.msra.mxu0 0
      %2320 = vmatprep.subr.bf16.mxu0 0
      %2321 = vmatpush1.bf16.msra.mxu0 0
      %2322 = vmatprep.subr.bf16.mxu0 0
      %2323 = vmatpush1.bf16.msra.mxu0 0
      %2324 = vmatprep.subr.bf16.mxu0 0
      %2325 = vmatpush1.bf16.msra.mxu0 0
      %2326 = vmatprep.subr.bf16.mxu0 0
      %2327 = vmatpush1.bf16.msra.mxu0 0
      %2328 = vmatprep.subr.bf16.mxu0 0
      %2329 = vmatpush1.bf16.msra.mxu0 0
      %2330 = vmatprep.subr.bf16.mxu0 0
      %2331 = vmatpush1.bf16.msra.mxu0 0
      %2332 = vmatprep.mubr.bf16.mxu0 0
      %2333 = vmatmul.mubr.bf16.gmra.mrb[0].mxu0 %v2225
      %v2334 = vpop.f32.mrb[0].mxu0
      %v2335 = vadd.f32 %v2250, %v2334
      %v2336 = vpop.f32.mrb[0].mxu0
      %v2337 = vpop.f32.mrb[0].mxu0
      %v2338 = vadd.f32 %v2250, %v2337
      %v2339 = vpop.f32.mrb[0].mxu0
      %2340 = vmatprep.mubr.bf16.mxu0 0
      %2341 = vmatmul.mubr.bf16.gmra.mrb[0].mxu0 %v2226
      %v2342 = vpop.f32.mrb[0].mxu0
      %v2343 = vadd.f32 %v2250, %v2342
      %v2344 = vpop.f32.mrb[0].mxu0
      %v2345 = vpop.f32.mrb[0].mxu0
      %v2346 = vadd.f32 %v2250, %v2345
      %v2347 = vpop.f32.mrb[0].mxu0
      %2348 = vmatprep.mubr.bf16.mxu0 0
      %2349 = vmatmul.mubr.bf16.gmra.mrb[0].mxu0 %v2227
      %v2350 = vpop.f32.mrb[0].mxu0
      %v2351 = vadd.f32 %v2250, %v2350
      %v2352 = vpop.f32.mrb[0].mxu0
      %v2353 = vpop.f32.mrb[0].mxu0
      %v2354 = vadd.f32 %v2250, %v2353
      %v2355 = vpop.f32.mrb[0].mxu0
      %2356 = vmatprep.mubr.bf16.mxu0 0
      %2357 = vmatmul.mubr.bf16.gmra.mrb[0].mxu0 %v2228
      %v2358 = vpop.f32.mrb[0].mxu0
      %v2359 = vadd.f32 %v2250, %v2358
      %v2360 = vpop.f32.mrb[0].mxu0
      %v2361 = vpop.f32.mrb[0].mxu0
      %v2362 = vadd.f32 %v2250, %v2361
      %v2363 = vpop.f32.mrb[0].mxu0
      %2364 = vdwg.mxu0
      %v2365 = vpack.c.bf16 %v424, %v422
      %v2366 = vpack.c.bf16 %v428, %v426
      %v2367 = vpack.c.bf16 %v432, %v430
      %v2368 = vpack.c.bf16 %v436, %v434
      %v2369 = vld [vmem:[%s7] sm:$0xf]
      %v2370 = vld [vmem:[%s7 + $0x4] sm:$0xf]
      %v2371 = vld [vmem:[%s7 + $0x8] sm:$0xf]
      %v2372 = vld [vmem:[%s7 + $0xc] sm:$0xf]
      %v2373 = vld [vmem:[%s7 + $0x10] sm:$0xf]
      %v2374 = vld [vmem:[%s7 + $0x14] sm:$0xf]
      %v2375 = vld [vmem:[%s7 + $0x18] sm:$0xf]
      %v2376 = vld [vmem:[%s7 + $0x1c] sm:$0xf]
      %v2377 = vld [vmem:[%s7 + $0x20] sm:$0xf]
      %v2378 = vld [vmem:[%s7 + $0x24] sm:$0xf]
      %v2379 = vld [vmem:[%s7 + $0x28] sm:$0xf]
      %v2380 = vld [vmem:[%s7 + $0x2c] sm:$0xf]
      %v2381 = vld [vmem:[%s7 + $0x30] sm:$0xf]
      %v2382 = vld [vmem:[%s7 + $0x34] sm:$0xf]
      %v2383 = vld [vmem:[%s7 + $0x38] sm:$0xf]
      %v2384 = vld [vmem:[%s7 + $0x3c] sm:$0xf]
      %v2385 = vld [vmem:[%s8] sm:$0x1]
      %v2387 = vlaneseq
      %v2388 = vshrl.u32 %v2387, 7
      %v2389 = vsub.s32 0, %v2388
      %v2390 = vrot.slane %v2385, %v2389
      %v2408 = vunpack.c.l.b16 %v2369
      %v2409 = vunpack.c.l.b16 %v2370
      %v2410 = vunpack.c.l.b16 %v2371
      %v2411 = vunpack.c.l.b16 %v2372
      %v2412 = vunpack.c.l.b16 %v2373
      %v2413 = vunpack.c.l.b16 %v2374
      %v2414 = vunpack.c.l.b16 %v2375
      %v2415 = vunpack.c.l.b16 %v2376
      %v2416 = vunpack.c.l.b16 %v2377
      %v2417 = vunpack.c.l.b16 %v2378
      %v2418 = vunpack.c.l.b16 %v2379
      %v2419 = vunpack.c.l.b16 %v2380
      %v2420 = vunpack.c.l.b16 %v2381
      %v2421 = vunpack.c.l.b16 %v2382
      %v2422 = vunpack.c.l.b16 %v2383
      %v2423 = vunpack.c.l.b16 %v2384
      %v2424 = vpack.c.b16 %v2409, %v2408
      %v2425 = vpack.c.b16 %v2411, %v2410
      %v2426 = vpack.c.b16 %v2413, %v2412
      %v2427 = vpack.c.b16 %v2415, %v2414
      %v2428 = vpack.c.b16 %v2417, %v2416
      %v2429 = vpack.c.b16 %v2419, %v2418
      %v2430 = vpack.c.b16 %v2421, %v2420
      %v2431 = vpack.c.b16 %v2423, %v2422
      %2440 = vmatprep.subr.bf16.mxu0 0
      %2441 = vmatpush1.bf16.msra.mxu0 %v2424
      %2442 = vmatprep.subr.bf16.mxu0 0
      %2443 = vmatpush1.bf16.msra.mxu0 %v2425
      %2444 = vmatprep.subr.bf16.mxu0 0
      %2445 = vmatpush1.bf16.msra.mxu0 %v2426
      %2446 = vmatprep.subr.bf16.mxu0 0
      %2447 = vmatpush1.bf16.msra.mxu0 %v2427
      %2448 = vmatprep.subr.bf16.mxu0 0
      %2449 = vmatpush1.bf16.msra.mxu0 %v2428
      %2450 = vmatprep.subr.bf16.mxu0 0
      %2451 = vmatpush1.bf16.msra.mxu0 %v2429
      %2452 = vmatprep.subr.bf16.mxu0 0
      %2453 = vmatpush1.bf16.msra.mxu0 %v2430
      %2454 = vmatprep.subr.bf16.mxu0 0
      %2455 = vmatpush1.bf16.msra.mxu0 %v2431
      %2456 = vmatprep.subr.bf16.mxu0 0
      %2457 = vmatpush1.bf16.msra.mxu0 0
      %2458 = vmatprep.subr.bf16.mxu0 0
      %2459 = vmatpush1.bf16.msra.mxu0 0
      %2460 = vmatprep.subr.bf16.mxu0 0
      %2461 = vmatpush1.bf16.msra.mxu0 0
      %2462 = vmatprep.subr.bf16.mxu0 0
      %2463 = vmatpush1.bf16.msra.mxu0 0
      %2464 = vmatprep.subr.bf16.mxu0 0
      %2465 = vmatpush1.bf16.msra.mxu0 0
      %2466 = vmatprep.subr.bf16.mxu0 0
      %2467 = vmatpush1.bf16.msra.mxu0 0
      %2468 = vmatprep.subr.bf16.mxu0 0
      %2469 = vmatpush1.bf16.msra.mxu0 0
      %2470 = vmatprep.subr.bf16.mxu0 0
      %2471 = vmatpush1.bf16.msra.mxu0 0
      %2472 = vmatprep.mubr.bf16.mxu0 0
      %2473 = vmatmul.mubr.bf16.gmra.mrb[0].mxu0 %v2365
      %v2474 = vpop.f32.mrb[0].mxu0
      %v2475 = vadd.f32 %v2390, %v2474
      %v2476 = vpop.f32.mrb[0].mxu0
      %v2477 = vpop.f32.mrb[0].mxu0
      %v2478 = vadd.f32 %v2390, %v2477
      %v2479 = vpop.f32.mrb[0].mxu0
      %2480 = vmatprep.mubr.bf16.mxu0 0
      %2481 = vmatmul.mubr.bf16.gmra.mrb[0].mxu0 %v2366
      %v2482 = vpop.f32.mrb[0].mxu0
      %v2483 = vadd.f32 %v2390, %v2482
      %v2484 = vpop.f32.mrb[0].mxu0
      %v2485 = vpop.f32.mrb[0].mxu0
      %v2486 = vadd.f32 %v2390, %v2485
      %v2487 = vpop.f32.mrb[0].mxu0
      %2488 = vmatprep.mubr.bf16.mxu0 0
      %2489 = vmatmul.mubr.bf16.gmra.mrb[0].mxu0 %v2367
      %v2490 = vpop.f32.mrb[0].mxu0
      %v2491 = vadd.f32 %v2390, %v2490
      %v2492 = vpop.f32.mrb[0].mxu0
      %v2493 = vpop.f32.mrb[0].mxu0
      %v2494 = vadd.f32 %v2390, %v2493
      %v2495 = vpop.f32.mrb[0].mxu0
      %2496 = vmatprep.mubr.bf16.mxu0 0
      %2497 = vmatmul.mubr.bf16.gmra.mrb[0].mxu0 %v2368
      %v2498 = vpop.f32.mrb[0].mxu0
      %v2499 = vadd.f32 %v2390, %v2498
      %v2500 = vpop.f32.mrb[0].mxu0
      %v2501 = vpop.f32.mrb[0].mxu0
      %v2502 = vadd.f32 %v2390, %v2501
      %v2503 = vpop.f32.mrb[0].mxu0
      %2504 = vdwg.mxu0
      %v2505 = vadd.f32 %v2335, %v2475
      %v2506 = vadd.f32 %v2338, %v2478
      %v2507 = vadd.f32 %v2343, %v2483
      %v2508 = vadd.f32 %v2346, %v2486
      %v2509 = vadd.f32 %v2351, %v2491
      %v2510 = vadd.f32 %v2354, %v2494
      %v2511 = vadd.f32 %v2359, %v2499
      %v2512 = vadd.f32 %v2362, %v2502
      %v2513 = vmax.f32 %v2505, 0.0
      %v2514 = vmax.f32 %v2506, 0.0
      %v2515 = vmax.f32 %v2507, 0.0
      %v2516 = vmax.f32 %v2508, 0.0
      %v2517 = vmax.f32 %v2509, 0.0
      %v2518 = vmax.f32 %v2510, 0.0
      %v2519 = vmax.f32 %v2511, 0.0
      %v2520 = vmax.f32 %v2512, 0.0
      %2521 = vst [vmem:[%s332] sm:$0xff] %v2513
      %2522 = vst [vmem:[%s332 + $0x8] sm:$0xff] %v2514
      %2523 = vst [vmem:[%s332 + $0x10] sm:$0xff] %v2515
      %2524 = vst [vmem:[%s332 + $0x18] sm:$0xff] %v2516
      %2525 = vst [vmem:[%s332 + $0x20] sm:$0xff] %v2517
      %2526 = vst [vmem:[%s332 + $0x28] sm:$0xff] %v2518
      %2527 = vst [vmem:[%s332 + $0x30] sm:$0xff] %v2519
      %2528 = vst [vmem:[%s332 + $0x38] sm:$0xff] %v2520
      %p2529 = scmp.lt.s32.totalorder %s20, 1
      %s2530 = scalar_select %p2529, %s20, 1
      %s2531 = smul.addr %s2530, 8
      %s2532 = smul.addr %s2531, 8
      %s2533 = scalar_lea.vmem %s9, %s2532
      // Predicated region
      $region57: #{bottleneck_forward.1} parent=55 // pred_check
        %p2534 = pneg %p232
      $region58: #{bottleneck_forward.1} parent=55 // pred_check_branch
        %2536 = sbr.rel (%p2534) target = $region60
      $region59: #{bottleneck_forward.1} parent=55 // pred_region
        _
      $region60: #{bottleneck_forward.1} parent=55 // pred_fallthru
        _
    $region56: #{bottleneck_forward.1} parent=5 // pred_fallthru
      _
    %p2537 = scmp.le.s32.totalorder 2, %s15
    // Predicated region
    $region61: #{bottleneck_forward.1} parent=5 // pred_check
      %p2538 = pneg %p2537
    $region62: #{bottleneck_forward.1} parent=5 // pred_check_branch
      %2540 = sbr.rel (%p2538) target = $region64
    $region63: #{bottleneck_forward.1} parent=5 // pred_region
      %s2541 = ssub.s32 %s15, 2
      // Predicated region
      $region65: #{bottleneck_forward.1} parent=63 // pred_check
        %p2542 = pneg %p238
      $region66: #{bottleneck_forward.1} parent=63 // pred_check_branch
        %2544 = sbr.rel (%p2542) target = $region68
      $region67: #{bottleneck_forward.1} parent=63 // pred_region
        %p2545 = scmp.lt.s32.totalorder %s21, 1
        %s2546 = scalar_select %p2545, %s21, 1
        %s2547 = smul.addr %s2546, 8
        %s2548 = smul.addr %s2547, 8
        %s2549 = scalar_lea.vmem %s9, %s2548
      $region68: #{bottleneck_forward.1} parent=63 // pred_fallthru
        _
    $region64: #{bottleneck_forward.1} parent=5 // pred_fallthru
      _
  $region6: #{bottleneck_forward.1} parent=0 // loop_footer
    %s19 = sadd.s32 1, %s15
  $region7: #{bottleneck_forward.1} parent=0 // loop_footer_branch
    %14 = sbr.rel target = $region3
  $region8: #{bottleneck_forward.1} parent=0 // loop_exit
    _

</llo_original>
